<compile_context>
chip_gen: v6e
topology: v6e:2x2x1
jax: 0.10.0
libtpu: 0.0.40
codegen_flags: <defaults>
</compile_context>

<pallas_src>
import numpy as np
import jax
import jax.numpy as jnp
from jax.experimental import pallas as pl
from jax.experimental.pallas import tpu as pltpu

# Keep kernel matmuls and the pure-JAX reference numerically comparable.
jax.config.update("jax_default_matmul_precision", "highest")

adjacency_matrix = np.array(
    [[0, 1, 0, 1, 0, 0, 0, 0, 0, 0],
     [1, 0, 1, 0, 1, 0, 0, 0, 0, 0],
     [0, 1, 0, 0, 0, 1, 0, 0, 0, 0],
     [1, 0, 0, 0, 1, 0, 1, 0, 0, 0],
     [0, 1, 0, 1, 0, 1, 0, 1, 0, 0],
     [0, 0, 1, 0, 1, 0, 0, 0, 1, 0],
     [0, 0, 0, 1, 0, 0, 0, 1, 0, 1],
     [0, 0, 0, 0, 1, 0, 1, 0, 1, 0],
     [0, 0, 0, 0, 0, 1, 0, 1, 0, 1],
     [0, 0, 0, 0, 0, 0, 1, 0, 1, 0]], dtype=np.float32)

feature_matrix = np.array(
    [[0.2, 0.4], [0.3, 0.6], [0.4, 0.8], [0.5, 1.0], [0.1, 0.2],
     [0.7, 0.9], [0.3, 0.5], [0.8, 0.2], [0.6, 0.4], [0.9, 0.7]],
    dtype=np.float32)


def gnn_kernel(adj_t_ref, feat_t_ref, w1_ref, b1_ref, w2_ref, b2_ref, out_ref):
    """One grid step = GB graphs packed into one block-diagonal 2D problem.

    adj_t_ref:  [M, M]       block-diagonal of per-graph A^T  (M = GB*N padded)
    feat_t_ref: [in_dim, M]  per-graph features, feature-major (F^T)
    w1_ref:     [H, in_dim]  fc1 weight (torch layout)
    b1_ref:     [H, 1]
    w2_ref:     [O, H]       fc2 weight (torch layout)
    b2_ref:     [O, 1]
    out_ref:    [O, M]       result, feature-major (Y^T)
    """
    At = adj_t_ref[...]
    ft = feat_t_ref[...]

    # x^T = F^T @ A^T            ( == (A @ F)^T )                       MXU
    xt = jnp.dot(ft, At, preferred_element_type=jnp.float32)
    # h^T = relu(W1 @ x^T + b1)                                         MXU+VPU
    ht = jnp.maximum(
        jnp.dot(w1_ref[...], xt, preferred_element_type=jnp.float32)
        + b1_ref[...], 0.0)
    # x^T = h^T @ A^T            ( == (A @ h)^T )                       MXU
    xt = jnp.dot(ht, At, preferred_element_type=jnp.float32)
    # y^T = W2 @ x^T + b2                                               MXU+VPU
    yt = (jnp.dot(w2_ref[...], xt, preferred_element_type=jnp.float32)
          + b2_ref[...])
    out_ref[...] = yt.astype(out_ref.dtype)


def _round_up(x, m):
    return ((x + m - 1) // m) * m


def _choose_graphs_per_block(batch, n_nodes, target_nodes=128):
    """GB*N ~ target_nodes (one MXU K tile); prefer GB dividing the batch."""
    gb = max(1, min(batch, max(1, target_nodes // n_nodes)))
    if batch % gb == 0:
        return gb
    for d in range(gb, 0, -1):          # exact divisor -> no dead padded graphs
        if batch % d == 0 and 2 * d >= gb:
            return d
    return gb                            # fall back to padding the batch


def gnn_forward(adj, feat, w1, b1, w2, b2, *, graphs_per_block=None,
                target_nodes=128):
    """Forward pass for a single graph ([N,N],[N,D]) or a batch ([B,N,N],[B,N,D])."""
    single = adj.ndim == 2
    if single:
        adj, feat = adj[None], feat[None]
    adj = adj.astype(jnp.float32)
    feat = feat.astype(jnp.float32)
    B, N, _ = adj.shape
    in_dim = feat.shape[-1]
    H = w1.shape[0]
    O = w2.shape[0]

    GB = graphs_per_block or _choose_graphs_per_block(B, N, target_nodes)
    nb = pl.cdiv(B, GB)
    B_pad = nb * GB
    if B_pad != B:
        adj = jnp.pad(adj, ((0, B_pad - B), (0, 0), (0, 0)))
        feat = jnp.pad(feat, ((0, B_pad - B), (0, 0), (0, 0)))

    M = GB * N
    M_pad = _round_up(M, 128)            # lane-dense slabs + full MXU K tile

    # ---- wrapper-side repack (plain XLA): block-diag A^T, feature-major F^T ----
    adj_t = jnp.swapaxes(adj, -1, -2).reshape(nb, GB, N, N)
    eye = jnp.eye(GB, dtype=jnp.float32)
    adj_bd = jnp.einsum('bgij,gh->bgihj', adj_t, eye).reshape(nb, M, M)
    adj_bd = jnp.pad(adj_bd, ((0, 0), (0, M_pad - M), (0, M_pad - M)))

    feat_t = jnp.transpose(feat.reshape(nb, GB, N, in_dim),
                           (0, 3, 1, 2)).reshape(nb, in_dim, M)
    feat_t = jnp.pad(feat_t, ((0, 0), (0, 0), (0, M_pad - M)))

    w1 = w1.astype(jnp.float32)
    w2 = w2.astype(jnp.float32)
    b1c = b1.reshape(H, 1).astype(jnp.float32)
    b2c = b2.reshape(O, 1).astype(jnp.float32)

    # ---- cost estimate over the padded bytes actually moved ----
    flops = nb * (2 * in_dim * M_pad * M_pad + 2 * H * in_dim * M_pad
                  + 2 * H * M_pad * M_pad + 2 * O * H * M_pad)
    bytes_accessed = 4 * (
        nb * (M_pad * M_pad
              + _round_up(in_dim, 8) * M_pad
              + _round_up(O, 8) * M_pad)
        + _round_up(H, 8) * 128 * 2                         # w1 + b1 tiles
        + _round_up(O, 8) * (_round_up(H, 128) + 128))      # w2 + b2 tiles

    out_t = pl.pallas_call(
        gnn_kernel,
        out_shape=jax.ShapeDtypeStruct((nb, O, M_pad), jnp.float32),
        grid=(nb,),
        in_specs=[
            pl.BlockSpec((None, M_pad, M_pad), lambda b: (b, 0, 0)),
            pl.BlockSpec((None, in_dim, M_pad), lambda b: (b, 0, 0)),
            # Params: same block every step -> fetched once, stay resident.
            pl.BlockSpec((H, in_dim), lambda b: (0, 0)),
            pl.BlockSpec((H, 1), lambda b: (0, 0)),
            pl.BlockSpec((O, H), lambda b: (0, 0)),
            pl.BlockSpec((O, 1), lambda b: (0, 0)),
        ],
        out_specs=pl.BlockSpec((None, O, M_pad), lambda b: (b, 0, 0)),
        # Batch-block axis is independent -> shards across the 2 TCs on v7x;
        # harmless single-TC loop on v5e/v6e.
        compiler_params=pltpu.CompilerParams(
            dimension_semantics=("parallel",)),
        cost_estimate=pl.CostEstimate(
            flops=flops, transcendentals=0, bytes_accessed=bytes_accessed),
    )(adj_bd, feat_t, w1, b1c, w2, b2c)

    # ---- un-transpose / unpack back to [B, N, out_dim] in XLA ----
    out = jnp.transpose(out_t[:, :, :M].reshape(nb, O, GB, N),
                        (0, 2, 3, 1)).reshape(B_pad, N, O)[:B]
    return out[0] if single else out


def init_linear_params(key, in_dim, out_dim):
    """nn.Linear-style init (uniform +-1/sqrt(fan_in)); W is [out, in] (torch layout)."""
    kw, kb = jax.random.split(key)
    bound = 1.0 / np.sqrt(in_dim)
    w = jax.random.uniform(kw, (out_dim, in_dim), jnp.float32, -bound, bound)
    b = jax.random.uniform(kb, (out_dim,), jnp.float32, -bound, bound)
    return w, b


if __name__ == "__main__":
    input_dim, hidden_dim, output_dim = 2, 16, 4
    N = adjacency_matrix.shape[0]
    B = 48          # -> GB=12 graphs/block (GB*N=120->128), grid=(4,)

    key = jax.random.PRNGKey(0)
    k1, k2, k3, k4 = jax.random.split(key, 4)
    w1, b1 = init_linear_params(k1, input_dim, hidden_dim)
    w2, b2 = init_linear_params(k2, hidden_dim, output_dim)

    adj0 = jnp.asarray(adjacency_matrix)
    feat0 = jnp.asarray(feature_matrix)

    # Graph 0 is the original spec graph; the rest are random 0/1 graphs
    # (not necessarily symmetric, exercising the transposed-aggregation path).
    rnd_adj = jax.random.bernoulli(k3, 0.3, (B - 1, N, N)).astype(jnp.float32)
    rnd_feat = jax.random.uniform(k4, (B - 1, N, input_dim), jnp.float32)
    adj_b = jnp.concatenate([adj0[None], rnd_adj], axis=0)
    feat_b = jnp.concatenate([feat0[None], rnd_feat], axis=0)

    out = jax.block_until_ready(gnn_forward(adj_b, feat_b, w1, b1, w2, b2))

    # Pure-JAX reference implementing the exact torch forward, per graph.
    def ref_one(A, F):
        x = A @ F
        x = jnp.maximum(x @ w1.T + b1, 0.0)
        x = A @ x
        return x @ w2.T + b2

    ref = jax.vmap(ref_one)(adj_b, feat_b)
    np.testing.assert_allclose(np.asarray(out), np.asarray(ref),
                               rtol=1e-3, atol=1e-4)

    # Single-graph path (original module call signature) also works.
    out_single = jax.block_until_ready(gnn_forward(adj0, feat0, w1, b1, w2, b2))
    np.testing.assert_allclose(np.asarray(out_single),
                               np.asarray(ref_one(adj0, feat0)),
                               rtol=1e-3, atol=1e-4)

    print("KERNEL_OK")
</pallas_src>

<mosaic_0001>
module attributes {stable_mosaic.version = 11 : i64} {
  func.func @gnn_kernel(%arg0: i32, %arg1: memref<1x128x128xf32, #tpu.memory_space<vmem>>, %arg2: memref<1x2x128xf32, #tpu.memory_space<vmem>>, %arg3: memref<16x2xf32, #tpu.memory_space<vmem>>, %arg4: memref<16x1xf32, #tpu.memory_space<vmem>>, %arg5: memref<4x16xf32, #tpu.memory_space<vmem>>, %arg6: memref<4x1xf32, #tpu.memory_space<vmem>>, %arg7: memref<1x4x128xf32, #tpu.memory_space<vmem>>) attributes {dimension_semantics = [#tpu.dimension_semantics<parallel>], iteration_bounds = array<i64: 4>, scalar_prefetch = 0 : i64, scratch_operands = 0 : i64, tpu.core_type = #tpu.core_type<tc>, window_params = [{transform_indices = @transform_0, window_bounds = array<i64: 1, 128, 128>}, {transform_indices = @transform_1, window_bounds = array<i64: 1, 2, 128>}, {pipeline_mode = #tpu.pipeline_mode<synchronous>, transform_indices = @transform_2, window_bounds = array<i64: 16, 2>}, {pipeline_mode = #tpu.pipeline_mode<synchronous>, transform_indices = @transform_3, window_bounds = array<i64: 16, 1>}, {pipeline_mode = #tpu.pipeline_mode<synchronous>, transform_indices = @transform_4, window_bounds = array<i64: 4, 16>}, {pipeline_mode = #tpu.pipeline_mode<synchronous>, transform_indices = @transform_5, window_bounds = array<i64: 4, 1>}, {transform_indices = @transform_6, window_bounds = array<i64: 1, 4, 128>}]} {
    %c0 = arith.constant 0 : index
    %c0_0 = arith.constant 0 : index
    %c0_1 = arith.constant 0 : index
    %0 = vector.load %arg1[%c0, %c0_0, %c0_1] : memref<1x128x128xf32, #tpu.memory_space<vmem>>, vector<1x128x128xf32>
    %1 = vector.shape_cast %0 : vector<1x128x128xf32> to vector<128x128xf32>
    %c0_2 = arith.constant 0 : index
    %c0_3 = arith.constant 0 : index
    %c0_4 = arith.constant 0 : index
    %2 = vector.load %arg2[%c0_2, %c0_3, %c0_4] : memref<1x2x128xf32, #tpu.memory_space<vmem>>, vector<1x2x128xf32>
    %3 = vector.shape_cast %2 : vector<1x2x128xf32> to vector<2x128xf32>
    %cst = arith.constant dense<0.000000e+00> : vector<2x128xf32>
    %4 = tpu.matmul %3, %1, %cst {dimension_numbers = #tpu.dot_dimension_numbers<[1], [0], [0], [1], [0, 0, 1, 1], [], []>, precision = #tpu.contract_precision<fp32>} : vector<2x128xf32>, vector<128x128xf32>, vector<2x128xf32> -> vector<2x128xf32>
    %c0_5 = arith.constant 0 : index
    %c0_6 = arith.constant 0 : index
    %5 = vector.load %arg3[%c0_5, %c0_6] : memref<16x2xf32, #tpu.memory_space<vmem>>, vector<16x2xf32>
    %cst_7 = arith.constant dense<0.000000e+00> : vector<16x128xf32>
    %6 = tpu.matmul %5, %4, %cst_7 {dimension_numbers = #tpu.dot_dimension_numbers<[1], [0], [0], [1], [0, 0, 1, 1], [], []>, precision = #tpu.contract_precision<fp32>} : vector<16x2xf32>, vector<2x128xf32>, vector<16x128xf32> -> vector<16x128xf32>
    %c0_8 = arith.constant 0 : index
    %c0_9 = arith.constant 0 : index
    %7 = vector.load %arg4[%c0_8, %c0_9] : memref<16x1xf32, #tpu.memory_space<vmem>>, vector<16x1xf32>
    %8 = vector.broadcast %7 : vector<16x1xf32> to vector<16x128xf32>
    %9 = arith.addf %6, %8 : vector<16x128xf32>
    %cst_10 = arith.constant 0.000000e+00 : f32
    %10 = vector.broadcast %cst_10 : f32 to vector<16x128xf32>
    %11 = arith.maximumf %9, %10 : vector<16x128xf32>
    %cst_11 = arith.constant dense<0.000000e+00> : vector<16x128xf32>
    %12 = tpu.matmul %11, %1, %cst_11 {dimension_numbers = #tpu.dot_dimension_numbers<[1], [0], [0], [1], [0, 0, 1, 1], [], []>, precision = #tpu.contract_precision<fp32>} : vector<16x128xf32>, vector<128x128xf32>, vector<16x128xf32> -> vector<16x128xf32>
    %c0_12 = arith.constant 0 : index
    %c0_13 = arith.constant 0 : index
    %13 = vector.load %arg5[%c0_12, %c0_13] : memref<4x16xf32, #tpu.memory_space<vmem>>, vector<4x16xf32>
    %cst_14 = arith.constant dense<0.000000e+00> : vector<4x128xf32>
    %14 = tpu.matmul %13, %12, %cst_14 {dimension_numbers = #tpu.dot_dimension_numbers<[1], [0], [0], [1], [0, 0, 1, 1], [], []>, precision = #tpu.contract_precision<fp32>} : vector<4x16xf32>, vector<16x128xf32>, vector<4x128xf32> -> vector<4x128xf32>
    %c0_15 = arith.constant 0 : index
    %c0_16 = arith.constant 0 : index
    %15 = vector.load %arg6[%c0_15, %c0_16] : memref<4x1xf32, #tpu.memory_space<vmem>>, vector<4x1xf32>
    %16 = vector.broadcast %15 : vector<4x1xf32> to vector<4x128xf32>
    %17 = arith.addf %14, %16 : vector<4x128xf32>
    %c0_17 = arith.constant 0 : index
    %c0_18 = arith.constant 0 : index
    %c0_19 = arith.constant 0 : index
    %18 = vector.load %arg7[%c0_17, %c0_18, %c0_19] : memref<1x4x128xf32, #tpu.memory_space<vmem>>, vector<1x4x128xf32>
    %19 = vector.shape_cast %18 : vector<1x4x128xf32> to vector<4x128xf32>
    %20 = vector.shape_cast %17 : vector<4x128xf32> to vector<1x4x128xf32>
    tpu.vector_store %arg7[%c0_17, %c0_18, %c0_19], %20 {strides = array<i32>} : memref<1x4x128xf32, #tpu.memory_space<vmem>>, vector<1x4x128xf32>,
    return
  }
  func.func @transform_0(%arg0: i32) -> (i32, i32, i32) {
    %c0_i32 = arith.constant 0 : i32
    %c0_i32_0 = arith.constant 0 : i32
    %c0_i32_1 = arith.constant 0 : i32
    return %arg0, %c0_i32, %c0_i32_0 : i32, i32, i32
  }
  func.func @transform_1(%arg0: i32) -> (i32, i32, i32) {
    %c0_i32 = arith.constant 0 : i32
    %c0_i32_0 = arith.constant 0 : i32
    %c0_i32_1 = arith.constant 0 : i32
    return %arg0, %c0_i32, %c0_i32_0 : i32, i32, i32
  }
  func.func @transform_2(%arg0: i32) -> (i32, i32) {
    %c0_i32 = arith.constant 0 : i32
    %c0_i32_0 = arith.constant 0 : i32
    %c0_i32_1 = arith.constant 0 : i32
    return %c0_i32, %c0_i32_0 : i32, i32
  }
  func.func @transform_3(%arg0: i32) -> (i32, i32) {
    %c0_i32 = arith.constant 0 : i32
    %c0_i32_0 = arith.constant 0 : i32
    %c0_i32_1 = arith.constant 0 : i32
    return %c0_i32, %c0_i32_0 : i32, i32
  }
  func.func @transform_4(%arg0: i32) -> (i32, i32) {
    %c0_i32 = arith.constant 0 : i32
    %c0_i32_0 = arith.constant 0 : i32
    %c0_i32_1 = arith.constant 0 : i32
    return %c0_i32, %c0_i32_0 : i32, i32
  }
  func.func @transform_5(%arg0: i32) -> (i32, i32) {
    %c0_i32 = arith.constant 0 : i32
    %c0_i32_0 = arith.constant 0 : i32
    %c0_i32_1 = arith.constant 0 : i32
    return %c0_i32, %c0_i32_0 : i32, i32
  }
  func.func @transform_6(%arg0: i32) -> (i32, i32, i32) {
    %c0_i32 = arith.constant 0 : i32
    %c0_i32_0 = arith.constant 0 : i32
    %c0_i32_1 = arith.constant 0 : i32
    return %arg0, %c0_i32, %c0_i32_0 : i32, i32, i32
  }
}

</mosaic_0001>

<llo_original>
// kernel: tpu_custom_call.1
$region0: #{tpu_custom_call.1}
  #allocation0 [shape = 'u32[]', space=smem, size = 0x4, offset = 0x4, fixed_abs, tag = 'smem constant byte address 0x4 - core index']
  #allocation1 [shape = 'u32[144,128]{1,0:T(1,128)}', space=vmem, size = 0x12000, scoped, tag = 'internal scratch']
  %s0 = inlined_call_operand.hbm [shape: f32[4,128,128], index: 0, kind: input, shape index: {}]
  %s1 = inlined_call_operand.vmem [shape: f32[4,2,128], index: 1, kind: input, shape index: {}]
  %s2 = inlined_call_operand.vmem [shape: f32[16,2], index: 2, kind: input, shape index: {}]
  %s3 = inlined_call_operand.vmem [shape: f32[16,1], index: 3, kind: input, shape index: {}]
  %s4 = inlined_call_operand.vmem [shape: f32[4,16], index: 4, kind: input, shape index: {}]
  %s5 = inlined_call_operand.vmem [shape: f32[4,1], index: 5, kind: input, shape index: {}]
  %s6 = inlined_call_operand.hbm [shape: f32[4,4,128], index: 6, kind: output, shape index: {}]
  %s7 = sld [smem:[#allocation0]]
  $region61: #{tpu_custom_call.1} parent=0
    _
  %s9 = ssub.s32 1, %s7
  %s10 = scalar_select 0, %s9, %s7
  $region1: #{tpu_custom_call.1} parent=0
    #allocation2 [shape = 'u8[131072]{0}', space=vmem, size = 0x20000, scoped, tag = 'input window, operand 0']
    #allocation3 [shape = 's32[2]{0}', space=sflag, size = 0x8, scoped, tag = 'scoped memory for tpu_custom_call.1']
    #allocation4 [shape = 's32[2]{0}', space=sflag, size = 0x8, scoped, tag = 'scoped memory for tpu_custom_call.1']
    #allocation5 [shape = 'u8[4096]{0}', space=vmem, size = 0x1000, scoped, tag = 'output window, operand 0']
    %11 = vsyncpa [#allocation3], 0
    %s12 = scalar_lea.sflag [#allocation3], 1
    %13 = vsyncpa %s12, 0
    %14 = vsyncpa [#allocation4], 0
    %s15 = scalar_lea.sflag [#allocation4], 1
    %16 = vsyncpa %s15, 0
    loop: start=0, step=1, limit=6
    $region2: #{tpu_custom_call.1} parent=1 // loop_pre_header
      _
    $region3: #{tpu_custom_call.1} parent=1 // loop_header
      %s18 = sphi 0, %s22
      %p19 = scmp.ge.s32.totalorder %s18, 6
      %s28 = sphi 0, %s30
      %s31 = sphi 0, %s28
      %s32 = sphi 0, %s31
      %s48 = sphi 0, %s32
      %s54 = sphi 0, %s56
      %s57 = sphi 0, %s54
      %s58 = sphi 0, %s57
      %s74 = sphi 0, %s58
      %s78 = sphi 0, %s78
      %s80 = sphi 0, %s78
      %s81 = sphi 0, %s80
      %s95 = sphi 0, %s81
      %s99 = sphi 0, %s99
      %s101 = sphi 0, %s99
      %s102 = sphi 0, %s101
      %s116 = sphi 0, %s102
      %s120 = sphi 0, %s120
      %s122 = sphi 0, %s120
      %s123 = sphi 0, %s122
      %s137 = sphi 0, %s123
      %s141 = sphi 0, %s141
      %s143 = sphi 0, %s141
      %s144 = sphi 0, %s143
      %s158 = sphi 0, %s144
      %s164 = sphi 0, %s166
      %s167 = sphi 0, %s164
      %s168 = sphi 0, %s167
      %s184 = sphi 0, %s168
    $region4: #{tpu_custom_call.1} parent=1 // loop_header_branch
      %21 = sbr.rel (%p19) target = $region8
    $region5: #{tpu_custom_call.1} parent=1 // loop_body
      %s23 = ssub.s32 %s18, 1
      %s24 = ssub.s32 %s18, 2
      %s25 = sadd.s32 %s18, 1
      %s26 = ssub.s32 %s18, %s25
      %p27 = scmp.eq.s32.totalorder %s26, 0
      %s29 = sadd.s32 %s28, 1
      %s30 = scalar_select %p27, %s28, %s29
      %p33 = pneg %p27
      %p34 = scmp.eq.s32.totalorder %s18, 3
      %p35 = por %p33, %p34
      %p36 = scmp.ne.s32.totalorder %s28, %s31
      %p37 = scmp.eq.s32.totalorder %s18, 0
      %p38 = por %p36, %p37
      %p39 = scmp.ne.s32.totalorder %s28, %s31
      %p40 = scmp.eq.s32.totalorder %s23, 3
      %p41 = por %p39, %p40
      %p42 = scmp.ne.s32.totalorder %s31, %s32
      %p43 = scmp.eq.s32.totalorder %s23, 0
      %p44 = por %p42, %p43
      %p45 = scmp.ne.s32.totalorder %s31, %s32
      %p46 = scmp.eq.s32.totalorder %s24, 3
      %p47 = por %p45, %p46
      %p49 = scmp.ne.s32.totalorder %s32, %s48
      %p50 = scmp.eq.s32.totalorder %s24, 0
      %p51 = por %p49, %p50
      %s52 = ssub.s32 %s18, %s25
      %p53 = scmp.eq.s32.totalorder %s52, 0
      %s55 = sadd.s32 %s54, 1
      %s56 = scalar_select %p53, %s54, %s55
      %p59 = pneg %p53
      %p60 = scmp.eq.s32.totalorder %s18, 3
      %p61 = por %p59, %p60
      %p62 = scmp.ne.s32.totalorder %s54, %s57
      %p63 = scmp.eq.s32.totalorder %s18, 0
      %p64 = por %p62, %p63
      %p65 = scmp.ne.s32.totalorder %s54, %s57
      %p66 = scmp.eq.s32.totalorder %s23, 3
      %p67 = por %p65, %p66
      %p68 = scmp.ne.s32.totalorder %s57, %s58
      %p69 = scmp.eq.s32.totalorder %s23, 0
      %p70 = por %p68, %p69
      %p71 = scmp.ne.s32.totalorder %s57, %s58
      %p72 = scmp.eq.s32.totalorder %s24, 3
      %p73 = por %p71, %p72
      %p75 = scmp.ne.s32.totalorder %s58, %s74
      %p76 = scmp.eq.s32.totalorder %s24, 0
      %p77 = por %p75, %p76
      %s79 = sadd.s32 %s78, 1
      %p82 = scmp.eq.s32.totalorder %s18, 3
      %p83 = scmp.ne.s32.totalorder %s78, %s80
      %p84 = scmp.eq.s32.totalorder %s18, 0
      %p85 = por %p83, %p84
      %p86 = scmp.ne.s32.totalorder %s78, %s80
      %p87 = scmp.eq.s32.totalorder %s23, 3
      %p88 = por %p86, %p87
      %p89 = scmp.ne.s32.totalorder %s80, %s81
      %p90 = scmp.eq.s32.totalorder %s23, 0
      %p91 = por %p89, %p90
      %p92 = scmp.ne.s32.totalorder %s80, %s81
      %p93 = scmp.eq.s32.totalorder %s24, 3
      %p94 = por %p92, %p93
      %p96 = scmp.ne.s32.totalorder %s81, %s95
      %p97 = scmp.eq.s32.totalorder %s24, 0
      %p98 = por %p96, %p97
      %s100 = sadd.s32 %s99, 1
      %p103 = scmp.eq.s32.totalorder %s18, 3
      %p104 = scmp.ne.s32.totalorder %s99, %s101
      %p105 = scmp.eq.s32.totalorder %s18, 0
      %p106 = por %p104, %p105
      %p107 = scmp.ne.s32.totalorder %s99, %s101
      %p108 = scmp.eq.s32.totalorder %s23, 3
      %p109 = por %p107, %p108
      %p110 = scmp.ne.s32.totalorder %s101, %s102
      %p111 = scmp.eq.s32.totalorder %s23, 0
      %p112 = por %p110, %p111
      %p113 = scmp.ne.s32.totalorder %s101, %s102
      %p114 = scmp.eq.s32.totalorder %s24, 3
      %p115 = por %p113, %p114
      %p117 = scmp.ne.s32.totalorder %s102, %s116
      %p118 = scmp.eq.s32.totalorder %s24, 0
      %p119 = por %p117, %p118
      %s121 = sadd.s32 %s120, 1
      %p124 = scmp.eq.s32.totalorder %s18, 3
      %p125 = scmp.ne.s32.totalorder %s120, %s122
      %p126 = scmp.eq.s32.totalorder %s18, 0
      %p127 = por %p125, %p126
      %p128 = scmp.ne.s32.totalorder %s120, %s122
      %p129 = scmp.eq.s32.totalorder %s23, 3
      %p130 = por %p128, %p129
      %p131 = scmp.ne.s32.totalorder %s122, %s123
      %p132 = scmp.eq.s32.totalorder %s23, 0
      %p133 = por %p131, %p132
      %p134 = scmp.ne.s32.totalorder %s122, %s123
      %p135 = scmp.eq.s32.totalorder %s24, 3
      %p136 = por %p134, %p135
      %p138 = scmp.ne.s32.totalorder %s123, %s137
      %p139 = scmp.eq.s32.totalorder %s24, 0
      %p140 = por %p138, %p139
      %s142 = sadd.s32 %s141, 1
      %p145 = scmp.eq.s32.totalorder %s18, 3
      %p146 = scmp.ne.s32.totalorder %s141, %s143
      %p147 = scmp.eq.s32.totalorder %s18, 0
      %p148 = por %p146, %p147
      %p149 = scmp.ne.s32.totalorder %s141, %s143
      %p150 = scmp.eq.s32.totalorder %s23, 3
      %p151 = por %p149, %p150
      %p152 = scmp.ne.s32.totalorder %s143, %s144
      %p153 = scmp.eq.s32.totalorder %s23, 0
      %p154 = por %p152, %p153
      %p155 = scmp.ne.s32.totalorder %s143, %s144
      %p156 = scmp.eq.s32.totalorder %s24, 3
      %p157 = por %p155, %p156
      %p159 = scmp.ne.s32.totalorder %s144, %s158
      %p160 = scmp.eq.s32.totalorder %s24, 0
      %p161 = por %p159, %p160
      %s162 = ssub.s32 %s18, %s25
      %p163 = scmp.eq.s32.totalorder %s162, 0
      %s165 = sadd.s32 %s164, 1
      %s166 = scalar_select %p163, %s164, %s165
      %p169 = pneg %p163
      %p170 = scmp.eq.s32.totalorder %s18, 3
      %p171 = por %p169, %p170
      %p172 = scmp.ne.s32.totalorder %s164, %s167
      %p173 = scmp.eq.s32.totalorder %s18, 0
      %p174 = por %p172, %p173
      %p175 = scmp.ne.s32.totalorder %s164, %s167
      %p176 = scmp.eq.s32.totalorder %s23, 3
      %p177 = por %p175, %p176
      %p178 = scmp.ne.s32.totalorder %s167, %s168
      %p179 = scmp.eq.s32.totalorder %s23, 0
      %p180 = por %p178, %p179
      %p181 = scmp.ne.s32.totalorder %s167, %s168
      %p182 = scmp.eq.s32.totalorder %s24, 3
      %p183 = por %p181, %p182
      %p185 = scmp.ne.s32.totalorder %s168, %s184
      %p186 = scmp.eq.s32.totalorder %s24, 0
      %p187 = por %p185, %p186
      %p188 = scmp.le.s32.totalorder 1, %s18
      %p189 = scmp.lt.s32.totalorder %s18, 5
      %p190 = pnand %p188, %p189
      %p191 = pneg %p190
      // Predicated region
      $region9: #{tpu_custom_call.1} parent=5 // pred_check
        _
      $region10: #{tpu_custom_call.1} parent=5 // pred_check_branch
        %193 = sbr.rel (%p190) target = $region12
      $region11: #{tpu_custom_call.1} parent=5 // pred_region
        %s194 = ssub.s32 %s18, 1
        // Predicated region
        $region13: #{tpu_custom_call.1} parent=11 // pred_check
          %p195 = pneg %p91
        $region14: #{tpu_custom_call.1} parent=11 // pred_check_branch
          %197 = sbr.rel (%p195) target = $region16
        $region15: #{tpu_custom_call.1} parent=11 // pred_region
          _
        $region16: #{tpu_custom_call.1} parent=11 // pred_fallthru
          _
        // Predicated region
        $region17: #{tpu_custom_call.1} parent=11 // pred_check
          %p198 = pneg %p112
        $region18: #{tpu_custom_call.1} parent=11 // pred_check_branch
          %200 = sbr.rel (%p198) target = $region20
        $region19: #{tpu_custom_call.1} parent=11 // pred_region
          _
        $region20: #{tpu_custom_call.1} parent=11 // pred_fallthru
          _
        // Predicated region
        $region21: #{tpu_custom_call.1} parent=11 // pred_check
          %p201 = pneg %p133
        $region22: #{tpu_custom_call.1} parent=11 // pred_check_branch
          %203 = sbr.rel (%p201) target = $region24
        $region23: #{tpu_custom_call.1} parent=11 // pred_region
          _
        $region24: #{tpu_custom_call.1} parent=11 // pred_fallthru
          _
        // Predicated region
        $region25: #{tpu_custom_call.1} parent=11 // pred_check
          %p204 = pneg %p154
        $region26: #{tpu_custom_call.1} parent=11 // pred_check_branch
          %206 = sbr.rel (%p204) target = $region28
        $region27: #{tpu_custom_call.1} parent=11 // pred_region
          _
        $region28: #{tpu_custom_call.1} parent=11 // pred_fallthru
          _
      $region12: #{tpu_custom_call.1} parent=5 // pred_fallthru
        _
      %p207 = scmp.lt.s32.totalorder %s18, 4
      // Predicated region
      $region29: #{tpu_custom_call.1} parent=5 // pred_check
        %p208 = pneg %p207
      $region30: #{tpu_custom_call.1} parent=5 // pred_check_branch
        %210 = sbr.rel (%p208) target = $region32
      $region31: #{tpu_custom_call.1} parent=5 // pred_region
        // Predicated region
        $region33: #{tpu_custom_call.1} parent=31 // pred_check
          %p211 = pneg %p38
        $region34: #{tpu_custom_call.1} parent=31 // pred_check_branch
          %213 = sbr.rel (%p211) target = $region36
        $region35: #{tpu_custom_call.1} parent=31 // pred_region
          %s214 = sand.u32 %s28, 1
          %s215 = scalar_lea.sflag [#allocation3], %s214
          %s216 = sand.u32 %s28, 1
          %s217 = smul.addr %s216, 128
          %s218 = scalar_lea.vmem [#allocation2], %s217
          %s220 = ssub.s32 2048, 2048
          %221 = vsyncadd %s215, %s220
          %s222 = smul.addr %s18, 16
          %s223 = smul.addr %s222, 128
          %s224 = scalar_lea.hbm %s0, %s223
          %s225 = sshll.u32 %s218, 4
          %s226 = int_to_ptr.vmem [resolvable:$true] %s225
          %231 = dma.hbm_to_vmem [thread:$0]  %s224, 2048, %s226, %s215, 128, 128, 8
        $region36: #{tpu_custom_call.1} parent=31 // pred_fallthru
          _
        // Predicated region
        $region37: #{tpu_custom_call.1} parent=31 // pred_check
          %p232 = pneg %p64
        $region38: #{tpu_custom_call.1} parent=31 // pred_check_branch
          %234 = sbr.rel (%p232) target = $region40
        $region39: #{tpu_custom_call.1} parent=31 // pred_region
          %p235 = scmp.lt.s32.totalorder %s18, 3
          %s236 = scalar_select %p235, %s18, 3
          %s237 = smul.addr %s236, 2
          %s238 = scalar_lea.vmem %s1, %s237
        $region40: #{tpu_custom_call.1} parent=31 // pred_fallthru
          _
      $region32: #{tpu_custom_call.1} parent=5 // pred_fallthru
        _
      %p239 = scmp.le.s32.totalorder 1, %s18
      %p240 = scmp.lt.s32.totalorder %s18, 5
      %p241 = pnand %p239, %p240
      %p242 = pneg %p241
      // Predicated region
      $region41: #{tpu_custom_call.1} parent=5 // pred_check
        _
      $region42: #{tpu_custom_call.1} parent=5 // pred_check_branch
        %244 = sbr.rel (%p241) target = $region44
      $region43: #{tpu_custom_call.1} parent=5 // pred_region
        %s245 = ssub.s32 %s18, 1
        %s246 = sand.u32 %s31, 1
        %s247 = scalar_lea.sflag [#allocation3], %s246
        %s248 = sand.u32 %s31, 1
        %s249 = smul.addr %s248, 128
        %s250 = scalar_lea.vmem [#allocation2], %s249
        // Predicated region
        $region45: #{tpu_custom_call.1} parent=43 // pred_check
          %p251 = pneg %p44
        $region46: #{tpu_custom_call.1} parent=43 // pred_check_branch
          %253 = sbr.rel (%p251) target = $region48
        $region47: #{tpu_custom_call.1} parent=43 // pred_region
          %254 = dma.done %s247, 2048
        $region48: #{tpu_custom_call.1} parent=43 // pred_fallthru
          _
        %s255 = sand.u32 %s31, 1
        %s256 = scalar_lea.sflag [#allocation3], %s255
        %s257 = sand.u32 %s31, 1
        %s258 = smul.addr %s257, 128
        %s259 = scalar_lea.vmem [#allocation2], %s258
        %p260 = pneg %p44
        %p261 = pneg %p41
        %p262 = scmp.lt.s32.totalorder %s23, 3
        %s263 = scalar_select %p262, %s23, 3
        %s264 = smul.addr %s263, 2
        %s265 = scalar_lea.vmem %s1, %s264
        %p266 = pneg %p70
        %p267 = pneg %p67
        %p268 = pneg %p91
        %p269 = pneg %p88
        %p270 = pneg %p112
        %p271 = pneg %p109
        %p272 = pneg %p133
        %p273 = pneg %p130
        %p274 = pneg %p154
        %p275 = pneg %p151
        %p276 = pneg %p180
        %p277 = pneg %p177
        %s278 = sand.u32 %s167, 1
        %s279 = scalar_lea.sflag [#allocation4], %s278
        %s280 = sand.u32 %s167, 1
        %s281 = smul.addr %s280, 4
        %s282 = scalar_lea.vmem [#allocation5], %s281
        %p283 = scmp.lt.s32.totalorder %s23, 3
        %s284 = scalar_select %p283, %s23, 3
        %s285 = smul.addr %s284, 2
        %s286 = scalar_lea.vmem %s1, %s285
        %v287 = vld [vmem:[%s250] sm:$0xff]
        %v288 = vld [vmem:[%s250 + $0x8] sm:$0xff]
        %v289 = vld [vmem:[%s250 + $0x10] sm:$0xff]
        %v290 = vld [vmem:[%s250 + $0x18] sm:$0xff]
        %v291 = vld [vmem:[%s250 + $0x20] sm:$0xff]
        %v292 = vld [vmem:[%s250 + $0x28] sm:$0xff]
        %v293 = vld [vmem:[%s250 + $0x30] sm:$0xff]
        %v294 = vld [vmem:[%s250 + $0x38] sm:$0xff]
        %v295 = vld [vmem:[%s250 + $0x40] sm:$0xff]
        %v296 = vld [vmem:[%s250 + $0x48] sm:$0xff]
        %v297 = vld [vmem:[%s250 + $0x50] sm:$0xff]
        %v298 = vld [vmem:[%s250 + $0x58] sm:$0xff]
        %v299 = vld [vmem:[%s250 + $0x60] sm:$0xff]
        %v300 = vld [vmem:[%s250 + $0x68] sm:$0xff]
        %v301 = vld [vmem:[%s250 + $0x70] sm:$0xff]
        %v302 = vld [vmem:[%s250 + $0x78] sm:$0xff]
        %v303 = vld [vmem:[%s286] sm:$0x3]
        %304 = vmatprep.subr.mxu0 0.0
        %v305 = vand.u32 %v302, 4294901760
        %306 = vmatpush1.msra.mxu0 %v305
        %307 = vmatprep.subr.mxu0 0.0
        %v308 = vand.u32 %v301, 4294901760
        %309 = vmatpush1.msra.mxu0 %v308
        %310 = vmatprep.subr.mxu0 0.0
        %v311 = vand.u32 %v300, 4294901760
        %312 = vmatpush1.msra.mxu0 %v311
        %313 = vmatprep.subr.mxu0 0.0
        %v314 = vand.u32 %v299, 4294901760
        %315 = vmatpush1.msra.mxu0 %v314
        %316 = vmatprep.subr.mxu0 0.0
        %v317 = vand.u32 %v298, 4294901760
        %318 = vmatpush1.msra.mxu0 %v317
        %319 = vmatprep.subr.mxu0 0.0
        %v320 = vand.u32 %v297, 4294901760
        %321 = vmatpush1.msra.mxu0 %v320
        %322 = vmatprep.subr.mxu0 0.0
        %v323 = vand.u32 %v296, 4294901760
        %324 = vmatpush1.msra.mxu0 %v323
        %325 = vmatprep.subr.mxu0 0.0
        %v326 = vand.u32 %v295, 4294901760
        %327 = vmatpush1.msra.mxu0 %v326
        %328 = vmatprep.subr.mxu0 0.0
        %v329 = vand.u32 %v294, 4294901760
        %330 = vmatpush1.msra.mxu0 %v329
        %331 = vmatprep.subr.mxu0 0.0
        %v332 = vand.u32 %v293, 4294901760
        %333 = vmatpush1.msra.mxu0 %v332
        %334 = vmatprep.subr.mxu0 0.0
        %v335 = vand.u32 %v292, 4294901760
        %336 = vmatpush1.msra.mxu0 %v335
        %337 = vmatprep.subr.mxu0 0.0
        %v338 = vand.u32 %v291, 4294901760
        %339 = vmatpush1.msra.mxu0 %v338
        %340 = vmatprep.subr.mxu0 0.0
        %v341 = vand.u32 %v290, 4294901760
        %342 = vmatpush1.msra.mxu0 %v341
        %343 = vmatprep.subr.mxu0 0.0
        %v344 = vand.u32 %v289, 4294901760
        %345 = vmatpush1.msra.mxu0 %v344
        %346 = vmatprep.subr.mxu0 0.0
        %v347 = vand.u32 %v288, 4294901760
        %348 = vmatpush1.msra.mxu0 %v347
        %349 = vmatprep.subr.mxu0 0.0
        %v350 = vand.u32 %v287, 4294901760
        %351 = vmatpush1.msra.mxu0 %v350
        %352 = vmatprep.subr.mxu0 0.0
        %353 = vmatpush2.msra.mxu0 0.0
        %354 = vmatprep.subr.mxu0 0.0
        %355 = vmatpush2.msra.mxu0 0.0
        %356 = vmatprep.subr.mxu0 0.0
        %357 = vmatpush2.msra.mxu0 0.0
        %358 = vmatprep.subr.mxu0 0.0
        %359 = vmatpush2.msra.mxu0 0.0
        %360 = vmatprep.subr.mxu0 0.0
        %361 = vmatpush2.msra.mxu0 0.0
        %362 = vmatprep.subr.mxu0 0.0
        %363 = vmatpush2.msra.mxu0 0.0
        %364 = vmatprep.subr.mxu0 0.0
        %365 = vmatpush2.msra.mxu0 0.0
        %366 = vmatprep.subr.mxu0 0.0
        %367 = vmatpush2.msra.mxu0 0.0
        %368 = vmatprep.subr.mxu0 0.0
        %369 = vmatpush2.msra.mxu0 0.0
        %370 = vmatprep.subr.mxu0 0.0
        %371 = vmatpush2.msra.mxu0 0.0
        %372 = vmatprep.subr.mxu0 0.0
        %373 = vmatpush2.msra.mxu0 0.0
        %374 = vmatprep.subr.mxu0 0.0
        %375 = vmatpush2.msra.mxu0 0.0
        %376 = vmatprep.subr.mxu0 0.0
        %377 = vmatpush2.msra.mxu0 0.0
        %378 = vmatprep.subr.mxu0 0.0
        %379 = vmatpush2.msra.mxu0 0.0
        %380 = vmatprep.subr.mxu0 0.0
        %381 = vmatpush2.msra.mxu0 0.0
        %382 = vmatprep.subr.mxu0 0.0
        %383 = vmatpush2.msra.mxu0 0.0
        %384 = vmatprep.mubr.f32.mxu0 0.0
        %v385 = vand.u32 %v303, 4294901760
        %v386 = vsub.f32 %v303, %v385
        %v387 = vand.u32 %v386, 4294901760
        %v388 = vsub.f32 %v386, %v387
        %v389 = vand.u32 %v388, 4294901760
        %390 = vmatmul.mubr.f32.gmra.mxu0 %v389
        %v391 = vpop.f32.mrf.mxu0
        %v392 = vadd.f32 0.0, %v391
        %v393 = vpop.f32.mrf.mxu0
        %394 = vdwg.mxu0
        %395 = vmatprep.subr.mxu0 0.0
        %v396 = vand.u32 %v302, 4294901760
        %v397 = vsub.f32 %v302, %v396
        %v398 = vand.u32 %v397, 4294901760
        %v399 = vsub.f32 %v397, %v398
        %v400 = vand.u32 %v399, 4294901760
        %401 = vmatpush1.msra.mxu0 %v400
        %402 = vmatprep.subr.mxu0 0.0
        %v403 = vand.u32 %v301, 4294901760
        %v404 = vsub.f32 %v301, %v403
        %v405 = vand.u32 %v404, 4294901760
        %v406 = vsub.f32 %v404, %v405
        %v407 = vand.u32 %v406, 4294901760
        %408 = vmatpush1.msra.mxu0 %v407
        %409 = vmatprep.subr.mxu0 0.0
        %v410 = vand.u32 %v300, 4294901760
        %v411 = vsub.f32 %v300, %v410
        %v412 = vand.u32 %v411, 4294901760
        %v413 = vsub.f32 %v411, %v412
        %v414 = vand.u32 %v413, 4294901760
        %415 = vmatpush1.msra.mxu0 %v414
        %416 = vmatprep.subr.mxu0 0.0
        %v417 = vand.u32 %v299, 4294901760
        %v418 = vsub.f32 %v299, %v417
        %v419 = vand.u32 %v418, 4294901760
        %v420 = vsub.f32 %v418, %v419
        %v421 = vand.u32 %v420, 4294901760
        %422 = vmatpush1.msra.mxu0 %v421
        %423 = vmatprep.subr.mxu0 0.0
        %v424 = vand.u32 %v298, 4294901760
        %v425 = vsub.f32 %v298, %v424
        %v426 = vand.u32 %v425, 4294901760
        %v427 = vsub.f32 %v425, %v426
        %v428 = vand.u32 %v427, 4294901760
        %429 = vmatpush1.msra.mxu0 %v428
        %430 = vmatprep.subr.mxu0 0.0
        %v431 = vand.u32 %v297, 4294901760
        %v432 = vsub.f32 %v297, %v431
        %v433 = vand.u32 %v432, 4294901760
        %v434 = vsub.f32 %v432, %v433
        %v435 = vand.u32 %v434, 4294901760
        %436 = vmatpush1.msra.mxu0 %v435
        %437 = vmatprep.subr.mxu0 0.0
        %v438 = vand.u32 %v296, 4294901760
        %v439 = vsub.f32 %v296, %v438
        %v440 = vand.u32 %v439, 4294901760
        %v441 = vsub.f32 %v439, %v440
        %v442 = vand.u32 %v441, 4294901760
        %443 = vmatpush1.msra.mxu0 %v442
        %444 = vmatprep.subr.mxu0 0.0
        %v445 = vand.u32 %v295, 4294901760
        %v446 = vsub.f32 %v295, %v445
        %v447 = vand.u32 %v446, 4294901760
        %v448 = vsub.f32 %v446, %v447
        %v449 = vand.u32 %v448, 4294901760
        %450 = vmatpush1.msra.mxu0 %v449
        %451 = vmatprep.subr.mxu0 0.0
        %v452 = vand.u32 %v294, 4294901760
        %v453 = vsub.f32 %v294, %v452
        %v454 = vand.u32 %v453, 4294901760
        %v455 = vsub.f32 %v453, %v454
        %v456 = vand.u32 %v455, 4294901760
        %457 = vmatpush1.msra.mxu0 %v456
        %458 = vmatprep.subr.mxu0 0.0
        %v459 = vand.u32 %v293, 4294901760
        %v460 = vsub.f32 %v293, %v459
        %v461 = vand.u32 %v460, 4294901760
        %v462 = vsub.f32 %v460, %v461
        %v463 = vand.u32 %v462, 4294901760
        %464 = vmatpush1.msra.mxu0 %v463
        %465 = vmatprep.subr.mxu0 0.0
        %v466 = vand.u32 %v292, 4294901760
        %v467 = vsub.f32 %v292, %v466
        %v468 = vand.u32 %v467, 4294901760
        %v469 = vsub.f32 %v467, %v468
        %v470 = vand.u32 %v469, 4294901760
        %471 = vmatpush1.msra.mxu0 %v470
        %472 = vmatprep.subr.mxu0 0.0
        %v473 = vand.u32 %v291, 4294901760
        %v474 = vsub.f32 %v291, %v473
        %v475 = vand.u32 %v474, 4294901760
        %v476 = vsub.f32 %v474, %v475
        %v477 = vand.u32 %v476, 4294901760
        %478 = vmatpush1.msra.mxu0 %v477
        %479 = vmatprep.subr.mxu0 0.0
        %v480 = vand.u32 %v290, 4294901760
        %v481 = vsub.f32 %v290, %v480
        %v482 = vand.u32 %v481, 4294901760
        %v483 = vsub.f32 %v481, %v482
        %v484 = vand.u32 %v483, 4294901760
        %485 = vmatpush1.msra.mxu0 %v484
        %486 = vmatprep.subr.mxu0 0.0
        %v487 = vand.u32 %v289, 4294901760
        %v488 = vsub.f32 %v289, %v487
        %v489 = vand.u32 %v488, 4294901760
        %v490 = vsub.f32 %v488, %v489
        %v491 = vand.u32 %v490, 4294901760
        %492 = vmatpush1.msra.mxu0 %v491
        %493 = vmatprep.subr.mxu0 0.0
        %v494 = vand.u32 %v288, 4294901760
        %v495 = vsub.f32 %v288, %v494
        %v496 = vand.u32 %v495, 4294901760
        %v497 = vsub.f32 %v495, %v496
        %v498 = vand.u32 %v497, 4294901760
        %499 = vmatpush1.msra.mxu0 %v498
        %500 = vmatprep.subr.mxu0 0.0
        %v501 = vand.u32 %v287, 4294901760
        %v502 = vsub.f32 %v287, %v501
        %v503 = vand.u32 %v502, 4294901760
        %v504 = vsub.f32 %v502, %v503
        %v505 = vand.u32 %v504, 4294901760
        %506 = vmatpush1.msra.mxu0 %v505
        %507 = vmatprep.subr.mxu0 0.0
        %508 = vmatpush2.msra.mxu0 0.0
        %509 = vmatprep.subr.mxu0 0.0
        %510 = vmatpush2.msra.mxu0 0.0
        %511 = vmatprep.subr.mxu0 0.0
        %512 = vmatpush2.msra.mxu0 0.0
        %513 = vmatprep.subr.mxu0 0.0
        %514 = vmatpush2.msra.mxu0 0.0
        %515 = vmatprep.subr.mxu0 0.0
        %516 = vmatpush2.msra.mxu0 0.0
        %517 = vmatprep.subr.mxu0 0.0
        %518 = vmatpush2.msra.mxu0 0.0
        %519 = vmatprep.subr.mxu0 0.0
        %520 = vmatpush2.msra.mxu0 0.0
        %521 = vmatprep.subr.mxu0 0.0
        %522 = vmatpush2.msra.mxu0 0.0
        %523 = vmatprep.subr.mxu0 0.0
        %524 = vmatpush2.msra.mxu0 0.0
        %525 = vmatprep.subr.mxu0 0.0
        %526 = vmatpush2.msra.mxu0 0.0
        %527 = vmatprep.subr.mxu0 0.0
        %528 = vmatpush2.msra.mxu0 0.0
        %529 = vmatprep.subr.mxu0 0.0
        %530 = vmatpush2.msra.mxu0 0.0
        %531 = vmatprep.subr.mxu0 0.0
        %532 = vmatpush2.msra.mxu0 0.0
        %533 = vmatprep.subr.mxu0 0.0
        %534 = vmatpush2.msra.mxu0 0.0
        %535 = vmatprep.subr.mxu0 0.0
        %536 = vmatpush2.msra.mxu0 0.0
        %537 = vmatprep.subr.mxu0 0.0
        %538 = vmatpush2.msra.mxu0 0.0
        %539 = vmatprep.mubr.f32.mxu0 0.0
        %v540 = vand.u32 %v303, 4294901760
        %541 = vmatmul.mubr.f32.gmra.mxu0 %v540
        %v542 = vpop.f32.mrf.mxu0
        %v543 = vadd.f32 %v392, %v542
        %v544 = vpop.f32.mrf.mxu0
        %545 = vdwg.mxu0
        %546 = vmatprep.subr.mxu0 0.0
        %v547 = vand.u32 %v302, 4294901760
        %v548 = vsub.f32 %v302, %v547
        %549 = vmatpush1.msra.mxu0 %v548
        %550 = vmatprep.subr.mxu0 0.0
        %v551 = vand.u32 %v301, 4294901760
        %v552 = vsub.f32 %v301, %v551
        %553 = vmatpush1.msra.mxu0 %v552
        %554 = vmatprep.subr.mxu0 0.0
        %v555 = vand.u32 %v300, 4294901760
        %v556 = vsub.f32 %v300, %v555
        %557 = vmatpush1.msra.mxu0 %v556
        %558 = vmatprep.subr.mxu0 0.0
        %v559 = vand.u32 %v299, 4294901760
        %v560 = vsub.f32 %v299, %v559
        %561 = vmatpush1.msra.mxu0 %v560
        %562 = vmatprep.subr.mxu0 0.0
        %v563 = vand.u32 %v298, 4294901760
        %v564 = vsub.f32 %v298, %v563
        %565 = vmatpush1.msra.mxu0 %v564
        %566 = vmatprep.subr.mxu0 0.0
        %v567 = vand.u32 %v297, 4294901760
        %v568 = vsub.f32 %v297, %v567
        %569 = vmatpush1.msra.mxu0 %v568
        %570 = vmatprep.subr.mxu0 0.0
        %v571 = vand.u32 %v296, 4294901760
        %v572 = vsub.f32 %v296, %v571
        %573 = vmatpush1.msra.mxu0 %v572
        %574 = vmatprep.subr.mxu0 0.0
        %v575 = vand.u32 %v295, 4294901760
        %v576 = vsub.f32 %v295, %v575
        %577 = vmatpush1.msra.mxu0 %v576
        %578 = vmatprep.subr.mxu0 0.0
        %v579 = vand.u32 %v294, 4294901760
        %v580 = vsub.f32 %v294, %v579
        %581 = vmatpush1.msra.mxu0 %v580
        %582 = vmatprep.subr.mxu0 0.0
        %v583 = vand.u32 %v293, 4294901760
        %v584 = vsub.f32 %v293, %v583
        %585 = vmatpush1.msra.mxu0 %v584
        %586 = vmatprep.subr.mxu0 0.0
        %v587 = vand.u32 %v292, 4294901760
        %v588 = vsub.f32 %v292, %v587
        %589 = vmatpush1.msra.mxu0 %v588
        %590 = vmatprep.subr.mxu0 0.0
        %v591 = vand.u32 %v291, 4294901760
        %v592 = vsub.f32 %v291, %v591
        %593 = vmatpush1.msra.mxu0 %v592
        %594 = vmatprep.subr.mxu0 0.0
        %v595 = vand.u32 %v290, 4294901760
        %v596 = vsub.f32 %v290, %v595
        %597 = vmatpush1.msra.mxu0 %v596
        %598 = vmatprep.subr.mxu0 0.0
        %v599 = vand.u32 %v289, 4294901760
        %v600 = vsub.f32 %v289, %v599
        %601 = vmatpush1.msra.mxu0 %v600
        %602 = vmatprep.subr.mxu0 0.0
        %v603 = vand.u32 %v288, 4294901760
        %v604 = vsub.f32 %v288, %v603
        %605 = vmatpush1.msra.mxu0 %v604
        %606 = vmatprep.subr.mxu0 0.0
        %v607 = vand.u32 %v287, 4294901760
        %v608 = vsub.f32 %v287, %v607
        %609 = vmatpush1.msra.mxu0 %v608
        %610 = vmatprep.subr.mxu0 0.0
        %611 = vmatpush2.msra.mxu0 0.0
        %612 = vmatprep.subr.mxu0 0.0
        %613 = vmatpush2.msra.mxu0 0.0
        %614 = vmatprep.subr.mxu0 0.0
        %615 = vmatpush2.msra.mxu0 0.0
        %616 = vmatprep.subr.mxu0 0.0
        %617 = vmatpush2.msra.mxu0 0.0
        %618 = vmatprep.subr.mxu0 0.0
        %619 = vmatpush2.msra.mxu0 0.0
        %620 = vmatprep.subr.mxu0 0.0
        %621 = vmatpush2.msra.mxu0 0.0
        %622 = vmatprep.subr.mxu0 0.0
        %623 = vmatpush2.msra.mxu0 0.0
        %624 = vmatprep.subr.mxu0 0.0
        %625 = vmatpush2.msra.mxu0 0.0
        %626 = vmatprep.subr.mxu0 0.0
        %627 = vmatpush2.msra.mxu0 0.0
        %628 = vmatprep.subr.mxu0 0.0
        %629 = vmatpush2.msra.mxu0 0.0
        %630 = vmatprep.subr.mxu0 0.0
        %631 = vmatpush2.msra.mxu0 0.0
        %632 = vmatprep.subr.mxu0 0.0
        %633 = vmatpush2.msra.mxu0 0.0
        %634 = vmatprep.subr.mxu0 0.0
        %635 = vmatpush2.msra.mxu0 0.0
        %636 = vmatprep.subr.mxu0 0.0
        %637 = vmatpush2.msra.mxu0 0.0
        %638 = vmatprep.subr.mxu0 0.0
        %639 = vmatpush2.msra.mxu0 0.0
        %640 = vmatprep.subr.mxu0 0.0
        %641 = vmatpush2.msra.mxu0 0.0
        %642 = vmatprep.mubr.f32.mxu0 0.0
        %v643 = vand.u32 %v303, 4294901760
        %v644 = vsub.f32 %v303, %v643
        %645 = vmatmul.mubr.f32.gmra.mxu0 %v644
        %v646 = vpop.f32.mrf.mxu0
        %v647 = vadd.f32 %v543, %v646
        %v648 = vpop.f32.mrf.mxu0
        %649 = vdwg.mxu0
        %650 = vmatprep.subr.mxu0 0.0
        %v651 = vand.u32 %v302, 4294901760
        %652 = vmatpush1.msra.mxu0 %v651
        %653 = vmatprep.subr.mxu0 0.0
        %v654 = vand.u32 %v301, 4294901760
        %655 = vmatpush1.msra.mxu0 %v654
        %656 = vmatprep.subr.mxu0 0.0
        %v657 = vand.u32 %v300, 4294901760
        %658 = vmatpush1.msra.mxu0 %v657
        %659 = vmatprep.subr.mxu0 0.0
        %v660 = vand.u32 %v299, 4294901760
        %661 = vmatpush1.msra.mxu0 %v660
        %662 = vmatprep.subr.mxu0 0.0
        %v663 = vand.u32 %v298, 4294901760
        %664 = vmatpush1.msra.mxu0 %v663
        %665 = vmatprep.subr.mxu0 0.0
        %v666 = vand.u32 %v297, 4294901760
        %667 = vmatpush1.msra.mxu0 %v666
        %668 = vmatprep.subr.mxu0 0.0
        %v669 = vand.u32 %v296, 4294901760
        %670 = vmatpush1.msra.mxu0 %v669
        %671 = vmatprep.subr.mxu0 0.0
        %v672 = vand.u32 %v295, 4294901760
        %673 = vmatpush1.msra.mxu0 %v672
        %674 = vmatprep.subr.mxu0 0.0
        %v675 = vand.u32 %v294, 4294901760
        %676 = vmatpush1.msra.mxu0 %v675
        %677 = vmatprep.subr.mxu0 0.0
        %v678 = vand.u32 %v293, 4294901760
        %679 = vmatpush1.msra.mxu0 %v678
        %680 = vmatprep.subr.mxu0 0.0
        %v681 = vand.u32 %v292, 4294901760
        %682 = vmatpush1.msra.mxu0 %v681
        %683 = vmatprep.subr.mxu0 0.0
        %v684 = vand.u32 %v291, 4294901760
        %685 = vmatpush1.msra.mxu0 %v684
        %686 = vmatprep.subr.mxu0 0.0
        %v687 = vand.u32 %v290, 4294901760
        %688 = vmatpush1.msra.mxu0 %v687
        %689 = vmatprep.subr.mxu0 0.0
        %v690 = vand.u32 %v289, 4294901760
        %691 = vmatpush1.msra.mxu0 %v690
        %692 = vmatprep.subr.mxu0 0.0
        %v693 = vand.u32 %v288, 4294901760
        %694 = vmatpush1.msra.mxu0 %v693
        %695 = vmatprep.subr.mxu0 0.0
        %v696 = vand.u32 %v287, 4294901760
        %697 = vmatpush1.msra.mxu0 %v696
        %698 = vmatprep.subr.mxu0 0.0
        %699 = vmatpush2.msra.mxu0 0.0
        %700 = vmatprep.subr.mxu0 0.0
        %701 = vmatpush2.msra.mxu0 0.0
        %702 = vmatprep.subr.mxu0 0.0
        %703 = vmatpush2.msra.mxu0 0.0
        %704 = vmatprep.subr.mxu0 0.0
        %705 = vmatpush2.msra.mxu0 0.0
        %706 = vmatprep.subr.mxu0 0.0
        %707 = vmatpush2.msra.mxu0 0.0
        %708 = vmatprep.subr.mxu0 0.0
        %709 = vmatpush2.msra.mxu0 0.0
        %710 = vmatprep.subr.mxu0 0.0
        %711 = vmatpush2.msra.mxu0 0.0
        %712 = vmatprep.subr.mxu0 0.0
        %713 = vmatpush2.msra.mxu0 0.0
        %714 = vmatprep.subr.mxu0 0.0
        %715 = vmatpush2.msra.mxu0 0.0
        %716 = vmatprep.subr.mxu0 0.0
        %717 = vmatpush2.msra.mxu0 0.0
        %718 = vmatprep.subr.mxu0 0.0
        %719 = vmatpush2.msra.mxu0 0.0
        %720 = vmatprep.subr.mxu0 0.0
        %721 = vmatpush2.msra.mxu0 0.0
        %722 = vmatprep.subr.mxu0 0.0
        %723 = vmatpush2.msra.mxu0 0.0
        %724 = vmatprep.subr.mxu0 0.0
        %725 = vmatpush2.msra.mxu0 0.0
        %726 = vmatprep.subr.mxu0 0.0
        %727 = vmatpush2.msra.mxu0 0.0
        %728 = vmatprep.subr.mxu0 0.0
        %729 = vmatpush2.msra.mxu0 0.0
        %730 = vmatprep.mubr.f32.mxu0 0.0
        %v731 = vand.u32 %v303, 4294901760
        %v732 = vsub.f32 %v303, %v731
        %v733 = vand.u32 %v732, 4294901760
        %734 = vmatmul.mubr.f32.gmra.mxu0 %v733
        %v735 = vpop.f32.mrf.mxu0
        %v736 = vadd.f32 %v647, %v735
        %v737 = vpop.f32.mrf.mxu0
        %738 = vdwg.mxu0
        %739 = vmatprep.subr.mxu0 0.0
        %v740 = vand.u32 %v302, 4294901760
        %v741 = vsub.f32 %v302, %v740
        %v742 = vand.u32 %v741, 4294901760
        %743 = vmatpush1.msra.mxu0 %v742
        %744 = vmatprep.subr.mxu0 0.0
        %v745 = vand.u32 %v301, 4294901760
        %v746 = vsub.f32 %v301, %v745
        %v747 = vand.u32 %v746, 4294901760
        %748 = vmatpush1.msra.mxu0 %v747
        %749 = vmatprep.subr.mxu0 0.0
        %v750 = vand.u32 %v300, 4294901760
        %v751 = vsub.f32 %v300, %v750
        %v752 = vand.u32 %v751, 4294901760
        %753 = vmatpush1.msra.mxu0 %v752
        %754 = vmatprep.subr.mxu0 0.0
        %v755 = vand.u32 %v299, 4294901760
        %v756 = vsub.f32 %v299, %v755
        %v757 = vand.u32 %v756, 4294901760
        %758 = vmatpush1.msra.mxu0 %v757
        %759 = vmatprep.subr.mxu0 0.0
        %v760 = vand.u32 %v298, 4294901760
        %v761 = vsub.f32 %v298, %v760
        %v762 = vand.u32 %v761, 4294901760
        %763 = vmatpush1.msra.mxu0 %v762
        %764 = vmatprep.subr.mxu0 0.0
        %v765 = vand.u32 %v297, 4294901760
        %v766 = vsub.f32 %v297, %v765
        %v767 = vand.u32 %v766, 4294901760
        %768 = vmatpush1.msra.mxu0 %v767
        %769 = vmatprep.subr.mxu0 0.0
        %v770 = vand.u32 %v296, 4294901760
        %v771 = vsub.f32 %v296, %v770
        %v772 = vand.u32 %v771, 4294901760
        %773 = vmatpush1.msra.mxu0 %v772
        %774 = vmatprep.subr.mxu0 0.0
        %v775 = vand.u32 %v295, 4294901760
        %v776 = vsub.f32 %v295, %v775
        %v777 = vand.u32 %v776, 4294901760
        %778 = vmatpush1.msra.mxu0 %v777
        %779 = vmatprep.subr.mxu0 0.0
        %v780 = vand.u32 %v294, 4294901760
        %v781 = vsub.f32 %v294, %v780
        %v782 = vand.u32 %v781, 4294901760
        %783 = vmatpush1.msra.mxu0 %v782
        %784 = vmatprep.subr.mxu0 0.0
        %v785 = vand.u32 %v293, 4294901760
        %v786 = vsub.f32 %v293, %v785
        %v787 = vand.u32 %v786, 4294901760
        %788 = vmatpush1.msra.mxu0 %v787
        %789 = vmatprep.subr.mxu0 0.0
        %v790 = vand.u32 %v292, 4294901760
        %v791 = vsub.f32 %v292, %v790
        %v792 = vand.u32 %v791, 4294901760
        %793 = vmatpush1.msra.mxu0 %v792
        %794 = vmatprep.subr.mxu0 0.0
        %v795 = vand.u32 %v291, 4294901760
        %v796 = vsub.f32 %v291, %v795
        %v797 = vand.u32 %v796, 4294901760
        %798 = vmatpush1.msra.mxu0 %v797
        %799 = vmatprep.subr.mxu0 0.0
        %v800 = vand.u32 %v290, 4294901760
        %v801 = vsub.f32 %v290, %v800
        %v802 = vand.u32 %v801, 4294901760
        %803 = vmatpush1.msra.mxu0 %v802
        %804 = vmatprep.subr.mxu0 0.0
        %v805 = vand.u32 %v289, 4294901760
        %v806 = vsub.f32 %v289, %v805
        %v807 = vand.u32 %v806, 4294901760
        %808 = vmatpush1.msra.mxu0 %v807
        %809 = vmatprep.subr.mxu0 0.0
        %v810 = vand.u32 %v288, 4294901760
        %v811 = vsub.f32 %v288, %v810
        %v812 = vand.u32 %v811, 4294901760
        %813 = vmatpush1.msra.mxu0 %v812
        %814 = vmatprep.subr.mxu0 0.0
        %v815 = vand.u32 %v287, 4294901760
        %v816 = vsub.f32 %v287, %v815
        %v817 = vand.u32 %v816, 4294901760
        %818 = vmatpush1.msra.mxu0 %v817
        %819 = vmatprep.subr.mxu0 0.0
        %820 = vmatpush2.msra.mxu0 0.0
        %821 = vmatprep.subr.mxu0 0.0
        %822 = vmatpush2.msra.mxu0 0.0
        %823 = vmatprep.subr.mxu0 0.0
        %824 = vmatpush2.msra.mxu0 0.0
        %825 = vmatprep.subr.mxu0 0.0
        %826 = vmatpush2.msra.mxu0 0.0
        %827 = vmatprep.subr.mxu0 0.0
        %828 = vmatpush2.msra.mxu0 0.0
        %829 = vmatprep.subr.mxu0 0.0
        %830 = vmatpush2.msra.mxu0 0.0
        %831 = vmatprep.subr.mxu0 0.0
        %832 = vmatpush2.msra.mxu0 0.0
        %833 = vmatprep.subr.mxu0 0.0
        %834 = vmatpush2.msra.mxu0 0.0
        %835 = vmatprep.subr.mxu0 0.0
        %836 = vmatpush2.msra.mxu0 0.0
        %837 = vmatprep.subr.mxu0 0.0
        %838 = vmatpush2.msra.mxu0 0.0
        %839 = vmatprep.subr.mxu0 0.0
        %840 = vmatpush2.msra.mxu0 0.0
        %841 = vmatprep.subr.mxu0 0.0
        %842 = vmatpush2.msra.mxu0 0.0
        %843 = vmatprep.subr.mxu0 0.0
        %844 = vmatpush2.msra.mxu0 0.0
        %845 = vmatprep.subr.mxu0 0.0
        %846 = vmatpush2.msra.mxu0 0.0
        %847 = vmatprep.subr.mxu0 0.0
        %848 = vmatpush2.msra.mxu0 0.0
        %849 = vmatprep.subr.mxu0 0.0
        %850 = vmatpush2.msra.mxu0 0.0
        %851 = vmatprep.mubr.f32.mxu0 0.0
        %v852 = vand.u32 %v303, 4294901760
        %853 = vmatmul.mubr.f32.gmra.mxu0 %v852
        %v854 = vpop.f32.mrf.mxu0
        %v855 = vadd.f32 %v736, %v854
        %v856 = vpop.f32.mrf.mxu0
        %857 = vdwg.mxu0
        %858 = vmatprep.subr.mxu0 0.0
        %v859 = vand.u32 %v302, 4294901760
        %860 = vmatpush1.msra.mxu0 %v859
        %861 = vmatprep.subr.mxu0 0.0
        %v862 = vand.u32 %v301, 4294901760
        %863 = vmatpush1.msra.mxu0 %v862
        %864 = vmatprep.subr.mxu0 0.0
        %v865 = vand.u32 %v300, 4294901760
        %866 = vmatpush1.msra.mxu0 %v865
        %867 = vmatprep.subr.mxu0 0.0
        %v868 = vand.u32 %v299, 4294901760
        %869 = vmatpush1.msra.mxu0 %v868
        %870 = vmatprep.subr.mxu0 0.0
        %v871 = vand.u32 %v298, 4294901760
        %872 = vmatpush1.msra.mxu0 %v871
        %873 = vmatprep.subr.mxu0 0.0
        %v874 = vand.u32 %v297, 4294901760
        %875 = vmatpush1.msra.mxu0 %v874
        %876 = vmatprep.subr.mxu0 0.0
        %v877 = vand.u32 %v296, 4294901760
        %878 = vmatpush1.msra.mxu0 %v877
        %879 = vmatprep.subr.mxu0 0.0
        %v880 = vand.u32 %v295, 4294901760
        %881 = vmatpush1.msra.mxu0 %v880
        %882 = vmatprep.subr.mxu0 0.0
        %v883 = vand.u32 %v294, 4294901760
        %884 = vmatpush1.msra.mxu0 %v883
        %885 = vmatprep.subr.mxu0 0.0
        %v886 = vand.u32 %v293, 4294901760
        %887 = vmatpush1.msra.mxu0 %v886
        %888 = vmatprep.subr.mxu0 0.0
        %v889 = vand.u32 %v292, 4294901760
        %890 = vmatpush1.msra.mxu0 %v889
        %891 = vmatprep.subr.mxu0 0.0
        %v892 = vand.u32 %v291, 4294901760
        %893 = vmatpush1.msra.mxu0 %v892
        %894 = vmatprep.subr.mxu0 0.0
        %v895 = vand.u32 %v290, 4294901760
        %896 = vmatpush1.msra.mxu0 %v895
        %897 = vmatprep.subr.mxu0 0.0
        %v898 = vand.u32 %v289, 4294901760
        %899 = vmatpush1.msra.mxu0 %v898
        %900 = vmatprep.subr.mxu0 0.0
        %v901 = vand.u32 %v288, 4294901760
        %902 = vmatpush1.msra.mxu0 %v901
        %903 = vmatprep.subr.mxu0 0.0
        %v904 = vand.u32 %v287, 4294901760
        %905 = vmatpush1.msra.mxu0 %v904
        %906 = vmatprep.subr.mxu0 0.0
        %907 = vmatpush2.msra.mxu0 0.0
        %908 = vmatprep.subr.mxu0 0.0
        %909 = vmatpush2.msra.mxu0 0.0
        %910 = vmatprep.subr.mxu0 0.0
        %911 = vmatpush2.msra.mxu0 0.0
        %912 = vmatprep.subr.mxu0 0.0
        %913 = vmatpush2.msra.mxu0 0.0
        %914 = vmatprep.subr.mxu0 0.0
        %915 = vmatpush2.msra.mxu0 0.0
        %916 = vmatprep.subr.mxu0 0.0
        %917 = vmatpush2.msra.mxu0 0.0
        %918 = vmatprep.subr.mxu0 0.0
        %919 = vmatpush2.msra.mxu0 0.0
        %920 = vmatprep.subr.mxu0 0.0
        %921 = vmatpush2.msra.mxu0 0.0
        %922 = vmatprep.subr.mxu0 0.0
        %923 = vmatpush2.msra.mxu0 0.0
        %924 = vmatprep.subr.mxu0 0.0
        %925 = vmatpush2.msra.mxu0 0.0
        %926 = vmatprep.subr.mxu0 0.0
        %927 = vmatpush2.msra.mxu0 0.0
        %928 = vmatprep.subr.mxu0 0.0
        %929 = vmatpush2.msra.mxu0 0.0
        %930 = vmatprep.subr.mxu0 0.0
        %931 = vmatpush2.msra.mxu0 0.0
        %932 = vmatprep.subr.mxu0 0.0
        %933 = vmatpush2.msra.mxu0 0.0
        %934 = vmatprep.subr.mxu0 0.0
        %935 = vmatpush2.msra.mxu0 0.0
        %936 = vmatprep.subr.mxu0 0.0
        %937 = vmatpush2.msra.mxu0 0.0
        %938 = vmatprep.mubr.f32.mxu0 0.0
        %v939 = vand.u32 %v303, 4294901760
        %940 = vmatmul.mubr.f32.gmra.mxu0 %v939
        %v941 = vpop.f32.mrf.mxu0
        %v942 = vadd.f32 %v855, %v941
        %v943 = vpop.f32.mrf.mxu0
        %944 = vdwg.mxu0
        %v945 = vld [vmem:[%s2] sm:$0xff]
        %v946 = vld [vmem:[%s2 + $0x8] sm:$0xff]
        %v947 = vld [vmem:[%s3] sm:$0xff]
        %v948 = vld [vmem:[%s3 + $0x8] sm:$0xff]
        %950 = vset.pattern.permute.xlu0 0
        %951 = vperm.xlu0 %950, %v947
        %v952 = vpop.permute.xlu0 %951
        %955 = vset.pattern.permute.xlu0 0
        %956 = vperm.xlu0 %955, %v948
        %v957 = vpop.permute.xlu0 %956
        %vm959 = vcmask 15360
        %v961 = vsel %vm959, %v945, 0
        %v964 = vsel %vm959, %v946, 0
        %vm966 = vcmask 1041408
        %v968 = vsel %vm966, %v942, 0
        %970 = vmatprep.subr.mxu0 0.0
        %971 = vmatpush1.msra.mxu0 0.0
        %972 = vmatprep.subr.mxu0 0.0
        %973 = vmatpush1.msra.mxu0 0.0
        %974 = vmatprep.subr.mxu0 0.0
        %975 = vmatpush1.msra.mxu0 0.0
        %976 = vmatprep.subr.mxu0 0.0
        %977 = vmatpush1.msra.mxu0 0.0
        %978 = vmatprep.subr.mxu0 0.0
        %979 = vmatpush1.msra.mxu0 0.0
        %980 = vmatprep.subr.mxu0 0.0
        %981 = vmatpush1.msra.mxu0 0.0
        %982 = vmatprep.subr.mxu0 0.0
        %983 = vmatpush1.msra.mxu0 0.0
        %984 = vmatprep.subr.mxu0 0.0
        %985 = vmatpush1.msra.mxu0 0.0
        %986 = vmatprep.subr.mxu0 0.0
        %987 = vmatpush1.msra.mxu0 0.0
        %988 = vmatprep.subr.mxu0 0.0
        %989 = vmatpush1.msra.mxu0 0.0
        %990 = vmatprep.subr.mxu0 0.0
        %991 = vmatpush1.msra.mxu0 0.0
        %992 = vmatprep.subr.mxu0 0.0
        %993 = vmatpush1.msra.mxu0 0.0
        %994 = vmatprep.subr.mxu0 0.0
        %995 = vmatpush1.msra.mxu0 0.0
        %996 = vmatprep.subr.mxu0 0.0
        %997 = vmatpush1.msra.mxu0 0.0
        %998 = vmatprep.subr.mxu0 0.0
        %999 = vmatpush1.msra.mxu0 0.0
        %1000 = vmatprep.subr.mxu0 0.0
        %v1001 = vand.u32 %v968, 4294901760
        %1002 = vmatpush1.msra.mxu0 %v1001
        %1003 = vmatprep.subr.mxu0 0.0
        %1004 = vmatpush2.msra.mxu0 0.0
        %1005 = vmatprep.subr.mxu0 0.0
        %1006 = vmatpush2.msra.mxu0 0.0
        %1007 = vmatprep.subr.mxu0 0.0
        %1008 = vmatpush2.msra.mxu0 0.0
        %1009 = vmatprep.subr.mxu0 0.0
        %1010 = vmatpush2.msra.mxu0 0.0
        %1011 = vmatprep.subr.mxu0 0.0
        %1012 = vmatpush2.msra.mxu0 0.0
        %1013 = vmatprep.subr.mxu0 0.0
        %1014 = vmatpush2.msra.mxu0 0.0
        %1015 = vmatprep.subr.mxu0 0.0
        %1016 = vmatpush2.msra.mxu0 0.0
        %1017 = vmatprep.subr.mxu0 0.0
        %1018 = vmatpush2.msra.mxu0 0.0
        %1019 = vmatprep.subr.mxu0 0.0
        %1020 = vmatpush2.msra.mxu0 0.0
        %1021 = vmatprep.subr.mxu0 0.0
        %1022 = vmatpush2.msra.mxu0 0.0
        %1023 = vmatprep.subr.mxu0 0.0
        %1024 = vmatpush2.msra.mxu0 0.0
        %1025 = vmatprep.subr.mxu0 0.0
        %1026 = vmatpush2.msra.mxu0 0.0
        %1027 = vmatprep.subr.mxu0 0.0
        %1028 = vmatpush2.msra.mxu0 0.0
        %1029 = vmatprep.subr.mxu0 0.0
        %1030 = vmatpush2.msra.mxu0 0.0
        %1031 = vmatprep.subr.mxu0 0.0
        %1032 = vmatpush2.msra.mxu0 0.0
        %1033 = vmatprep.subr.mxu0 0.0
        %1034 = vmatpush2.msra.mxu0 0.0
        %1035 = vmatprep.mubr.f32.mxu0 0.0
        %v1036 = vand.u32 %v961, 4294901760
        %v1037 = vsub.f32 %v961, %v1036
        %v1038 = vand.u32 %v1037, 4294901760
        %v1039 = vsub.f32 %v1037, %v1038
        %v1040 = vand.u32 %v1039, 4294901760
        %1041 = vmatmul.mubr.f32.gmra.mxu0 %v1040
        %v1042 = vpop.f32.mrf.mxu0
        %v1043 = vadd.f32 %v952, %v1042
        %v1044 = vpop.f32.mrf.mxu0
        %1045 = vmatprep.mubr.f32.mxu0 0.0
        %v1046 = vand.u32 %v964, 4294901760
        %v1047 = vsub.f32 %v964, %v1046
        %v1048 = vand.u32 %v1047, 4294901760
        %v1049 = vsub.f32 %v1047, %v1048
        %v1050 = vand.u32 %v1049, 4294901760
        %1051 = vmatmul.mubr.f32.gmra.mxu0 %v1050
        %v1052 = vpop.f32.mrf.mxu0
        %v1053 = vadd.f32 %v957, %v1052
        %v1054 = vpop.f32.mrf.mxu0
        %1055 = vdwg.mxu0
        %1056 = vmatprep.subr.mxu0 0.0
        %1057 = vmatpush1.msra.mxu0 0.0
        %1058 = vmatprep.subr.mxu0 0.0
        %1059 = vmatpush1.msra.mxu0 0.0
        %1060 = vmatprep.subr.mxu0 0.0
        %1061 = vmatpush1.msra.mxu0 0.0
        %1062 = vmatprep.subr.mxu0 0.0
        %1063 = vmatpush1.msra.mxu0 0.0
        %1064 = vmatprep.subr.mxu0 0.0
        %1065 = vmatpush1.msra.mxu0 0.0
        %1066 = vmatprep.subr.mxu0 0.0
        %1067 = vmatpush1.msra.mxu0 0.0
        %1068 = vmatprep.subr.mxu0 0.0
        %1069 = vmatpush1.msra.mxu0 0.0
        %1070 = vmatprep.subr.mxu0 0.0
        %1071 = vmatpush1.msra.mxu0 0.0
        %1072 = vmatprep.subr.mxu0 0.0
        %1073 = vmatpush1.msra.mxu0 0.0
        %1074 = vmatprep.subr.mxu0 0.0
        %1075 = vmatpush1.msra.mxu0 0.0
        %1076 = vmatprep.subr.mxu0 0.0
        %1077 = vmatpush1.msra.mxu0 0.0
        %1078 = vmatprep.subr.mxu0 0.0
        %1079 = vmatpush1.msra.mxu0 0.0
        %1080 = vmatprep.subr.mxu0 0.0
        %1081 = vmatpush1.msra.mxu0 0.0
        %1082 = vmatprep.subr.mxu0 0.0
        %1083 = vmatpush1.msra.mxu0 0.0
        %1084 = vmatprep.subr.mxu0 0.0
        %1085 = vmatpush1.msra.mxu0 0.0
        %1086 = vmatprep.subr.mxu0 0.0
        %v1087 = vand.u32 %v968, 4294901760
        %v1088 = vsub.f32 %v968, %v1087
        %v1089 = vand.u32 %v1088, 4294901760
        %v1090 = vsub.f32 %v1088, %v1089
        %v1091 = vand.u32 %v1090, 4294901760
        %1092 = vmatpush1.msra.mxu0 %v1091
        %1093 = vmatprep.subr.mxu0 0.0
        %1094 = vmatpush2.msra.mxu0 0.0
        %1095 = vmatprep.subr.mxu0 0.0
        %1096 = vmatpush2.msra.mxu0 0.0
        %1097 = vmatprep.subr.mxu0 0.0
        %1098 = vmatpush2.msra.mxu0 0.0
        %1099 = vmatprep.subr.mxu0 0.0
        %1100 = vmatpush2.msra.mxu0 0.0
        %1101 = vmatprep.subr.mxu0 0.0
        %1102 = vmatpush2.msra.mxu0 0.0
        %1103 = vmatprep.subr.mxu0 0.0
        %1104 = vmatpush2.msra.mxu0 0.0
        %1105 = vmatprep.subr.mxu0 0.0
        %1106 = vmatpush2.msra.mxu0 0.0
        %1107 = vmatprep.subr.mxu0 0.0
        %1108 = vmatpush2.msra.mxu0 0.0
        %1109 = vmatprep.subr.mxu0 0.0
        %1110 = vmatpush2.msra.mxu0 0.0
        %1111 = vmatprep.subr.mxu0 0.0
        %1112 = vmatpush2.msra.mxu0 0.0
        %1113 = vmatprep.subr.mxu0 0.0
        %1114 = vmatpush2.msra.mxu0 0.0
        %1115 = vmatprep.subr.mxu0 0.0
        %1116 = vmatpush2.msra.mxu0 0.0
        %1117 = vmatprep.subr.mxu0 0.0
        %1118 = vmatpush2.msra.mxu0 0.0
        %1119 = vmatprep.subr.mxu0 0.0
        %1120 = vmatpush2.msra.mxu0 0.0
        %1121 = vmatprep.subr.mxu0 0.0
        %1122 = vmatpush2.msra.mxu0 0.0
        %1123 = vmatprep.subr.mxu0 0.0
        %1124 = vmatpush2.msra.mxu0 0.0
        %1125 = vmatprep.mubr.f32.mxu0 0.0
        %v1126 = vand.u32 %v961, 4294901760
        %1127 = vmatmul.mubr.f32.gmra.mxu0 %v1126
        %v1128 = vpop.f32.mrf.mxu0
        %v1129 = vadd.f32 %v1043, %v1128
        %v1130 = vpop.f32.mrf.mxu0
        %1131 = vmatprep.mubr.f32.mxu0 0.0
        %v1132 = vand.u32 %v964, 4294901760
        %1133 = vmatmul.mubr.f32.gmra.mxu0 %v1132
        %v1134 = vpop.f32.mrf.mxu0
        %v1135 = vadd.f32 %v1053, %v1134
        %v1136 = vpop.f32.mrf.mxu0
        %1137 = vdwg.mxu0
        %1138 = vmatprep.subr.mxu0 0.0
        %1139 = vmatpush1.msra.mxu0 0.0
        %1140 = vmatprep.subr.mxu0 0.0
        %1141 = vmatpush1.msra.mxu0 0.0
        %1142 = vmatprep.subr.mxu0 0.0
        %1143 = vmatpush1.msra.mxu0 0.0
        %1144 = vmatprep.subr.mxu0 0.0
        %1145 = vmatpush1.msra.mxu0 0.0
        %1146 = vmatprep.subr.mxu0 0.0
        %1147 = vmatpush1.msra.mxu0 0.0
        %1148 = vmatprep.subr.mxu0 0.0
        %1149 = vmatpush1.msra.mxu0 0.0
        %1150 = vmatprep.subr.mxu0 0.0
        %1151 = vmatpush1.msra.mxu0 0.0
        %1152 = vmatprep.subr.mxu0 0.0
        %1153 = vmatpush1.msra.mxu0 0.0
        %1154 = vmatprep.subr.mxu0 0.0
        %1155 = vmatpush1.msra.mxu0 0.0
        %1156 = vmatprep.subr.mxu0 0.0
        %1157 = vmatpush1.msra.mxu0 0.0
        %1158 = vmatprep.subr.mxu0 0.0
        %1159 = vmatpush1.msra.mxu0 0.0
        %1160 = vmatprep.subr.mxu0 0.0
        %1161 = vmatpush1.msra.mxu0 0.0
        %1162 = vmatprep.subr.mxu0 0.0
        %1163 = vmatpush1.msra.mxu0 0.0
        %1164 = vmatprep.subr.mxu0 0.0
        %1165 = vmatpush1.msra.mxu0 0.0
        %1166 = vmatprep.subr.mxu0 0.0
        %1167 = vmatpush1.msra.mxu0 0.0
        %1168 = vmatprep.subr.mxu0 0.0
        %v1169 = vand.u32 %v968, 4294901760
        %v1170 = vsub.f32 %v968, %v1169
        %1171 = vmatpush1.msra.mxu0 %v1170
        %1172 = vmatprep.subr.mxu0 0.0
        %1173 = vmatpush2.msra.mxu0 0.0
        %1174 = vmatprep.subr.mxu0 0.0
        %1175 = vmatpush2.msra.mxu0 0.0
        %1176 = vmatprep.subr.mxu0 0.0
        %1177 = vmatpush2.msra.mxu0 0.0
        %1178 = vmatprep.subr.mxu0 0.0
        %1179 = vmatpush2.msra.mxu0 0.0
        %1180 = vmatprep.subr.mxu0 0.0
        %1181 = vmatpush2.msra.mxu0 0.0
        %1182 = vmatprep.subr.mxu0 0.0
        %1183 = vmatpush2.msra.mxu0 0.0
        %1184 = vmatprep.subr.mxu0 0.0
        %1185 = vmatpush2.msra.mxu0 0.0
        %1186 = vmatprep.subr.mxu0 0.0
        %1187 = vmatpush2.msra.mxu0 0.0
        %1188 = vmatprep.subr.mxu0 0.0
        %1189 = vmatpush2.msra.mxu0 0.0
        %1190 = vmatprep.subr.mxu0 0.0
        %1191 = vmatpush2.msra.mxu0 0.0
        %1192 = vmatprep.subr.mxu0 0.0
        %1193 = vmatpush2.msra.mxu0 0.0
        %1194 = vmatprep.subr.mxu0 0.0
        %1195 = vmatpush2.msra.mxu0 0.0
        %1196 = vmatprep.subr.mxu0 0.0
        %1197 = vmatpush2.msra.mxu0 0.0
        %1198 = vmatprep.subr.mxu0 0.0
        %1199 = vmatpush2.msra.mxu0 0.0
        %1200 = vmatprep.subr.mxu0 0.0
        %1201 = vmatpush2.msra.mxu0 0.0
        %1202 = vmatprep.subr.mxu0 0.0
        %1203 = vmatpush2.msra.mxu0 0.0
        %1204 = vmatprep.mubr.f32.mxu0 0.0
        %v1205 = vand.u32 %v961, 4294901760
        %v1206 = vsub.f32 %v961, %v1205
        %1207 = vmatmul.mubr.f32.gmra.mxu0 %v1206
        %v1208 = vpop.f32.mrf.mxu0
        %v1209 = vadd.f32 %v1129, %v1208
        %v1210 = vpop.f32.mrf.mxu0
        %1211 = vmatprep.mubr.f32.mxu0 0.0
        %v1212 = vand.u32 %v964, 4294901760
        %v1213 = vsub.f32 %v964, %v1212
        %1214 = vmatmul.mubr.f32.gmra.mxu0 %v1213
        %v1215 = vpop.f32.mrf.mxu0
        %v1216 = vadd.f32 %v1135, %v1215
        %v1217 = vpop.f32.mrf.mxu0
        %1218 = vdwg.mxu0
        %1219 = vmatprep.subr.mxu0 0.0
        %1220 = vmatpush1.msra.mxu0 0.0
        %1221 = vmatprep.subr.mxu0 0.0
        %1222 = vmatpush1.msra.mxu0 0.0
        %1223 = vmatprep.subr.mxu0 0.0
        %1224 = vmatpush1.msra.mxu0 0.0
        %1225 = vmatprep.subr.mxu0 0.0
        %1226 = vmatpush1.msra.mxu0 0.0
        %1227 = vmatprep.subr.mxu0 0.0
        %1228 = vmatpush1.msra.mxu0 0.0
        %1229 = vmatprep.subr.mxu0 0.0
        %1230 = vmatpush1.msra.mxu0 0.0
        %1231 = vmatprep.subr.mxu0 0.0
        %1232 = vmatpush1.msra.mxu0 0.0
        %1233 = vmatprep.subr.mxu0 0.0
        %1234 = vmatpush1.msra.mxu0 0.0
        %1235 = vmatprep.subr.mxu0 0.0
        %1236 = vmatpush1.msra.mxu0 0.0
        %1237 = vmatprep.subr.mxu0 0.0
        %1238 = vmatpush1.msra.mxu0 0.0
        %1239 = vmatprep.subr.mxu0 0.0
        %1240 = vmatpush1.msra.mxu0 0.0
        %1241 = vmatprep.subr.mxu0 0.0
        %1242 = vmatpush1.msra.mxu0 0.0
        %1243 = vmatprep.subr.mxu0 0.0
        %1244 = vmatpush1.msra.mxu0 0.0
        %1245 = vmatprep.subr.mxu0 0.0
        %1246 = vmatpush1.msra.mxu0 0.0
        %1247 = vmatprep.subr.mxu0 0.0
        %1248 = vmatpush1.msra.mxu0 0.0
        %1249 = vmatprep.subr.mxu0 0.0
        %v1250 = vand.u32 %v968, 4294901760
        %1251 = vmatpush1.msra.mxu0 %v1250
        %1252 = vmatprep.subr.mxu0 0.0
        %1253 = vmatpush2.msra.mxu0 0.0
        %1254 = vmatprep.subr.mxu0 0.0
        %1255 = vmatpush2.msra.mxu0 0.0
        %1256 = vmatprep.subr.mxu0 0.0
        %1257 = vmatpush2.msra.mxu0 0.0
        %1258 = vmatprep.subr.mxu0 0.0
        %1259 = vmatpush2.msra.mxu0 0.0
        %1260 = vmatprep.subr.mxu0 0.0
        %1261 = vmatpush2.msra.mxu0 0.0
        %1262 = vmatprep.subr.mxu0 0.0
        %1263 = vmatpush2.msra.mxu0 0.0
        %1264 = vmatprep.subr.mxu0 0.0
        %1265 = vmatpush2.msra.mxu0 0.0
        %1266 = vmatprep.subr.mxu0 0.0
        %1267 = vmatpush2.msra.mxu0 0.0
        %1268 = vmatprep.subr.mxu0 0.0
        %1269 = vmatpush2.msra.mxu0 0.0
        %1270 = vmatprep.subr.mxu0 0.0
        %1271 = vmatpush2.msra.mxu0 0.0
        %1272 = vmatprep.subr.mxu0 0.0
        %1273 = vmatpush2.msra.mxu0 0.0
        %1274 = vmatprep.subr.mxu0 0.0
        %1275 = vmatpush2.msra.mxu0 0.0
        %1276 = vmatprep.subr.mxu0 0.0
        %1277 = vmatpush2.msra.mxu0 0.0
        %1278 = vmatprep.subr.mxu0 0.0
        %1279 = vmatpush2.msra.mxu0 0.0
        %1280 = vmatprep.subr.mxu0 0.0
        %1281 = vmatpush2.msra.mxu0 0.0
        %1282 = vmatprep.subr.mxu0 0.0
        %1283 = vmatpush2.msra.mxu0 0.0
        %1284 = vmatprep.mubr.f32.mxu0 0.0
        %v1285 = vand.u32 %v961, 4294901760
        %v1286 = vsub.f32 %v961, %v1285
        %v1287 = vand.u32 %v1286, 4294901760
        %1288 = vmatmul.mubr.f32.gmra.mxu0 %v1287
        %v1289 = vpop.f32.mrf.mxu0
        %v1290 = vadd.f32 %v1209, %v1289
        %v1291 = vpop.f32.mrf.mxu0
        %1292 = vmatprep.mubr.f32.mxu0 0.0
        %v1293 = vand.u32 %v964, 4294901760
        %v1294 = vsub.f32 %v964, %v1293
        %v1295 = vand.u32 %v1294, 4294901760
        %1296 = vmatmul.mubr.f32.gmra.mxu0 %v1295
        %v1297 = vpop.f32.mrf.mxu0
        %v1298 = vadd.f32 %v1216, %v1297
        %v1299 = vpop.f32.mrf.mxu0
        %1300 = vdwg.mxu0
        %1301 = vmatprep.subr.mxu0 0.0
        %1302 = vmatpush1.msra.mxu0 0.0
        %1303 = vmatprep.subr.mxu0 0.0
        %1304 = vmatpush1.msra.mxu0 0.0
        %1305 = vmatprep.subr.mxu0 0.0
        %1306 = vmatpush1.msra.mxu0 0.0
        %1307 = vmatprep.subr.mxu0 0.0
        %1308 = vmatpush1.msra.mxu0 0.0
        %1309 = vmatprep.subr.mxu0 0.0
        %1310 = vmatpush1.msra.mxu0 0.0
        %1311 = vmatprep.subr.mxu0 0.0
        %1312 = vmatpush1.msra.mxu0 0.0
        %1313 = vmatprep.subr.mxu0 0.0
        %1314 = vmatpush1.msra.mxu0 0.0
        %1315 = vmatprep.subr.mxu0 0.0
        %1316 = vmatpush1.msra.mxu0 0.0
        %1317 = vmatprep.subr.mxu0 0.0
        %1318 = vmatpush1.msra.mxu0 0.0
        %1319 = vmatprep.subr.mxu0 0.0
        %1320 = vmatpush1.msra.mxu0 0.0
        %1321 = vmatprep.subr.mxu0 0.0
        %1322 = vmatpush1.msra.mxu0 0.0
        %1323 = vmatprep.subr.mxu0 0.0
        %1324 = vmatpush1.msra.mxu0 0.0
        %1325 = vmatprep.subr.mxu0 0.0
        %1326 = vmatpush1.msra.mxu0 0.0
        %1327 = vmatprep.subr.mxu0 0.0
        %1328 = vmatpush1.msra.mxu0 0.0
        %1329 = vmatprep.subr.mxu0 0.0
        %1330 = vmatpush1.msra.mxu0 0.0
        %1331 = vmatprep.subr.mxu0 0.0
        %v1332 = vand.u32 %v968, 4294901760
        %v1333 = vsub.f32 %v968, %v1332
        %v1334 = vand.u32 %v1333, 4294901760
        %1335 = vmatpush1.msra.mxu0 %v1334
        %1336 = vmatprep.subr.mxu0 0.0
        %1337 = vmatpush2.msra.mxu0 0.0
        %1338 = vmatprep.subr.mxu0 0.0
        %1339 = vmatpush2.msra.mxu0 0.0
        %1340 = vmatprep.subr.mxu0 0.0
        %1341 = vmatpush2.msra.mxu0 0.0
        %1342 = vmatprep.subr.mxu0 0.0
        %1343 = vmatpush2.msra.mxu0 0.0
        %1344 = vmatprep.subr.mxu0 0.0
        %1345 = vmatpush2.msra.mxu0 0.0
        %1346 = vmatprep.subr.mxu0 0.0
        %1347 = vmatpush2.msra.mxu0 0.0
        %1348 = vmatprep.subr.mxu0 0.0
        %1349 = vmatpush2.msra.mxu0 0.0
        %1350 = vmatprep.subr.mxu0 0.0
        %1351 = vmatpush2.msra.mxu0 0.0
        %1352 = vmatprep.subr.mxu0 0.0
        %1353 = vmatpush2.msra.mxu0 0.0
        %1354 = vmatprep.subr.mxu0 0.0
        %1355 = vmatpush2.msra.mxu0 0.0
        %1356 = vmatprep.subr.mxu0 0.0
        %1357 = vmatpush2.msra.mxu0 0.0
        %1358 = vmatprep.subr.mxu0 0.0
        %1359 = vmatpush2.msra.mxu0 0.0
        %1360 = vmatprep.subr.mxu0 0.0
        %1361 = vmatpush2.msra.mxu0 0.0
        %1362 = vmatprep.subr.mxu0 0.0
        %1363 = vmatpush2.msra.mxu0 0.0
        %1364 = vmatprep.subr.mxu0 0.0
        %1365 = vmatpush2.msra.mxu0 0.0
        %1366 = vmatprep.subr.mxu0 0.0
        %1367 = vmatpush2.msra.mxu0 0.0
        %1368 = vmatprep.mubr.f32.mxu0 0.0
        %v1369 = vand.u32 %v961, 4294901760
        %1370 = vmatmul.mubr.f32.gmra.mxu0 %v1369
        %v1371 = vpop.f32.mrf.mxu0
        %v1372 = vadd.f32 %v1290, %v1371
        %v1373 = vpop.f32.mrf.mxu0
        %1374 = vmatprep.mubr.f32.mxu0 0.0
        %v1375 = vand.u32 %v964, 4294901760
        %1376 = vmatmul.mubr.f32.gmra.mxu0 %v1375
        %v1377 = vpop.f32.mrf.mxu0
        %v1378 = vadd.f32 %v1298, %v1377
        %v1379 = vpop.f32.mrf.mxu0
        %1380 = vdwg.mxu0
        %1381 = vmatprep.subr.mxu0 0.0
        %1382 = vmatpush1.msra.mxu0 0.0
        %1383 = vmatprep.subr.mxu0 0.0
        %1384 = vmatpush1.msra.mxu0 0.0
        %1385 = vmatprep.subr.mxu0 0.0
        %1386 = vmatpush1.msra.mxu0 0.0
        %1387 = vmatprep.subr.mxu0 0.0
        %1388 = vmatpush1.msra.mxu0 0.0
        %1389 = vmatprep.subr.mxu0 0.0
        %1390 = vmatpush1.msra.mxu0 0.0
        %1391 = vmatprep.subr.mxu0 0.0
        %1392 = vmatpush1.msra.mxu0 0.0
        %1393 = vmatprep.subr.mxu0 0.0
        %1394 = vmatpush1.msra.mxu0 0.0
        %1395 = vmatprep.subr.mxu0 0.0
        %1396 = vmatpush1.msra.mxu0 0.0
        %1397 = vmatprep.subr.mxu0 0.0
        %1398 = vmatpush1.msra.mxu0 0.0
        %1399 = vmatprep.subr.mxu0 0.0
        %1400 = vmatpush1.msra.mxu0 0.0
        %1401 = vmatprep.subr.mxu0 0.0
        %1402 = vmatpush1.msra.mxu0 0.0
        %1403 = vmatprep.subr.mxu0 0.0
        %1404 = vmatpush1.msra.mxu0 0.0
        %1405 = vmatprep.subr.mxu0 0.0
        %1406 = vmatpush1.msra.mxu0 0.0
        %1407 = vmatprep.subr.mxu0 0.0
        %1408 = vmatpush1.msra.mxu0 0.0
        %1409 = vmatprep.subr.mxu0 0.0
        %1410 = vmatpush1.msra.mxu0 0.0
        %1411 = vmatprep.subr.mxu0 0.0
        %v1412 = vand.u32 %v968, 4294901760
        %1413 = vmatpush1.msra.mxu0 %v1412
        %1414 = vmatprep.subr.mxu0 0.0
        %1415 = vmatpush2.msra.mxu0 0.0
        %1416 = vmatprep.subr.mxu0 0.0
        %1417 = vmatpush2.msra.mxu0 0.0
        %1418 = vmatprep.subr.mxu0 0.0
        %1419 = vmatpush2.msra.mxu0 0.0
        %1420 = vmatprep.subr.mxu0 0.0
        %1421 = vmatpush2.msra.mxu0 0.0
        %1422 = vmatprep.subr.mxu0 0.0
        %1423 = vmatpush2.msra.mxu0 0.0
        %1424 = vmatprep.subr.mxu0 0.0
        %1425 = vmatpush2.msra.mxu0 0.0
        %1426 = vmatprep.subr.mxu0 0.0
        %1427 = vmatpush2.msra.mxu0 0.0
        %1428 = vmatprep.subr.mxu0 0.0
        %1429 = vmatpush2.msra.mxu0 0.0
        %1430 = vmatprep.subr.mxu0 0.0
        %1431 = vmatpush2.msra.mxu0 0.0
        %1432 = vmatprep.subr.mxu0 0.0
        %1433 = vmatpush2.msra.mxu0 0.0
        %1434 = vmatprep.subr.mxu0 0.0
        %1435 = vmatpush2.msra.mxu0 0.0
        %1436 = vmatprep.subr.mxu0 0.0
        %1437 = vmatpush2.msra.mxu0 0.0
        %1438 = vmatprep.subr.mxu0 0.0
        %1439 = vmatpush2.msra.mxu0 0.0
        %1440 = vmatprep.subr.mxu0 0.0
        %1441 = vmatpush2.msra.mxu0 0.0
        %1442 = vmatprep.subr.mxu0 0.0
        %1443 = vmatpush2.msra.mxu0 0.0
        %1444 = vmatprep.subr.mxu0 0.0
        %1445 = vmatpush2.msra.mxu0 0.0
        %1446 = vmatprep.mubr.f32.mxu0 0.0
        %v1447 = vand.u32 %v961, 4294901760
        %1448 = vmatmul.mubr.f32.gmra.mxu0 %v1447
        %v1449 = vpop.f32.mrf.mxu0
        %v1450 = vadd.f32 %v1372, %v1449
        %v1451 = vpop.f32.mrf.mxu0
        %1452 = vmatprep.mubr.f32.mxu0 0.0
        %v1453 = vand.u32 %v964, 4294901760
        %1454 = vmatmul.mubr.f32.gmra.mxu0 %v1453
        %v1455 = vpop.f32.mrf.mxu0
        %v1456 = vadd.f32 %v1378, %v1455
        %v1457 = vpop.f32.mrf.mxu0
        %1458 = vdwg.mxu0
        %v1459 = vmax.f32 %v1450, 0.0
        %v1460 = vmax.f32 %v1456, 0.0
        %1461 = vmatprep.subr.mxu0 0.0
        %v1462 = vand.u32 %v302, 4294901760
        %1463 = vmatpush1.msra.mxu0 %v1462
        %1464 = vmatprep.subr.mxu0 0.0
        %v1465 = vand.u32 %v301, 4294901760
        %1466 = vmatpush1.msra.mxu0 %v1465
        %1467 = vmatprep.subr.mxu0 0.0
        %v1468 = vand.u32 %v300, 4294901760
        %1469 = vmatpush1.msra.mxu0 %v1468
        %1470 = vmatprep.subr.mxu0 0.0
        %v1471 = vand.u32 %v299, 4294901760
        %1472 = vmatpush1.msra.mxu0 %v1471
        %1473 = vmatprep.subr.mxu0 0.0
        %v1474 = vand.u32 %v298, 4294901760
        %1475 = vmatpush1.msra.mxu0 %v1474
        %1476 = vmatprep.subr.mxu0 0.0
        %v1477 = vand.u32 %v297, 4294901760
        %1478 = vmatpush1.msra.mxu0 %v1477
        %1479 = vmatprep.subr.mxu0 0.0
        %v1480 = vand.u32 %v296, 4294901760
        %1481 = vmatpush1.msra.mxu0 %v1480
        %1482 = vmatprep.subr.mxu0 0.0
        %v1483 = vand.u32 %v295, 4294901760
        %1484 = vmatpush1.msra.mxu0 %v1483
        %1485 = vmatprep.subr.mxu0 0.0
        %v1486 = vand.u32 %v294, 4294901760
        %1487 = vmatpush1.msra.mxu0 %v1486
        %1488 = vmatprep.subr.mxu0 0.0
        %v1489 = vand.u32 %v293, 4294901760
        %1490 = vmatpush1.msra.mxu0 %v1489
        %1491 = vmatprep.subr.mxu0 0.0
        %v1492 = vand.u32 %v292, 4294901760
        %1493 = vmatpush1.msra.mxu0 %v1492
        %1494 = vmatprep.subr.mxu0 0.0
        %v1495 = vand.u32 %v291, 4294901760
        %1496 = vmatpush1.msra.mxu0 %v1495
        %1497 = vmatprep.subr.mxu0 0.0
        %v1498 = vand.u32 %v290, 4294901760
        %1499 = vmatpush1.msra.mxu0 %v1498
        %1500 = vmatprep.subr.mxu0 0.0
        %v1501 = vand.u32 %v289, 4294901760
        %1502 = vmatpush1.msra.mxu0 %v1501
        %1503 = vmatprep.subr.mxu0 0.0
        %v1504 = vand.u32 %v288, 4294901760
        %1505 = vmatpush1.msra.mxu0 %v1504
        %1506 = vmatprep.subr.mxu0 0.0
        %v1507 = vand.u32 %v287, 4294901760
        %1508 = vmatpush1.msra.mxu0 %v1507
        %1509 = vmatprep.subr.mxu0 0.0
        %1510 = vmatpush2.msra.mxu0 0.0
        %1511 = vmatprep.subr.mxu0 0.0
        %1512 = vmatpush2.msra.mxu0 0.0
        %1513 = vmatprep.subr.mxu0 0.0
        %1514 = vmatpush2.msra.mxu0 0.0
        %1515 = vmatprep.subr.mxu0 0.0
        %1516 = vmatpush2.msra.mxu0 0.0
        %1517 = vmatprep.subr.mxu0 0.0
        %1518 = vmatpush2.msra.mxu0 0.0
        %1519 = vmatprep.subr.mxu0 0.0
        %1520 = vmatpush2.msra.mxu0 0.0
        %1521 = vmatprep.subr.mxu0 0.0
        %1522 = vmatpush2.msra.mxu0 0.0
        %1523 = vmatprep.subr.mxu0 0.0
        %1524 = vmatpush2.msra.mxu0 0.0
        %1525 = vmatprep.subr.mxu0 0.0
        %1526 = vmatpush2.msra.mxu0 0.0
        %1527 = vmatprep.subr.mxu0 0.0
        %1528 = vmatpush2.msra.mxu0 0.0
        %1529 = vmatprep.subr.mxu0 0.0
        %1530 = vmatpush2.msra.mxu0 0.0
        %1531 = vmatprep.subr.mxu0 0.0
        %1532 = vmatpush2.msra.mxu0 0.0
        %1533 = vmatprep.subr.mxu0 0.0
        %1534 = vmatpush2.msra.mxu0 0.0
        %1535 = vmatprep.subr.mxu0 0.0
        %1536 = vmatpush2.msra.mxu0 0.0
        %1537 = vmatprep.subr.mxu0 0.0
        %1538 = vmatpush2.msra.mxu0 0.0
        %1539 = vmatprep.subr.mxu0 0.0
        %1540 = vmatpush2.msra.mxu0 0.0
        %1541 = vmatprep.mubr.f32.mxu0 0.0
        %v1542 = vand.u32 %v1459, 4294901760
        %v1543 = vsub.f32 %v1459, %v1542
        %v1544 = vand.u32 %v1543, 4294901760
        %v1545 = vsub.f32 %v1543, %v1544
        %v1546 = vand.u32 %v1545, 4294901760
        %1547 = vmatmul.mubr.f32.gmra.mxu0 %v1546
        %v1548 = vpop.f32.mrf.mxu0
        %v1549 = vadd.f32 0.0, %v1548
        %v1550 = vpop.f32.mrf.mxu0
        %1551 = vmatprep.mubr.f32.mxu0 0.0
        %v1552 = vand.u32 %v1460, 4294901760
        %v1553 = vsub.f32 %v1460, %v1552
        %v1554 = vand.u32 %v1553, 4294901760
        %v1555 = vsub.f32 %v1553, %v1554
        %v1556 = vand.u32 %v1555, 4294901760
        %1557 = vmatmul.mubr.f32.gmra.mxu0 %v1556
        %v1558 = vpop.f32.mrf.mxu0
        %v1559 = vadd.f32 0.0, %v1558
        %v1560 = vpop.f32.mrf.mxu0
        %1561 = vdwg.mxu0
        %1562 = vmatprep.subr.mxu0 0.0
        %v1563 = vand.u32 %v302, 4294901760
        %v1564 = vsub.f32 %v302, %v1563
        %v1565 = vand.u32 %v1564, 4294901760
        %v1566 = vsub.f32 %v1564, %v1565
        %v1567 = vand.u32 %v1566, 4294901760
        %1568 = vmatpush1.msra.mxu0 %v1567
        %1569 = vmatprep.subr.mxu0 0.0
        %v1570 = vand.u32 %v301, 4294901760
        %v1571 = vsub.f32 %v301, %v1570
        %v1572 = vand.u32 %v1571, 4294901760
        %v1573 = vsub.f32 %v1571, %v1572
        %v1574 = vand.u32 %v1573, 4294901760
        %1575 = vmatpush1.msra.mxu0 %v1574
        %1576 = vmatprep.subr.mxu0 0.0
        %v1577 = vand.u32 %v300, 4294901760
        %v1578 = vsub.f32 %v300, %v1577
        %v1579 = vand.u32 %v1578, 4294901760
        %v1580 = vsub.f32 %v1578, %v1579
        %v1581 = vand.u32 %v1580, 4294901760
        %1582 = vmatpush1.msra.mxu0 %v1581
        %1583 = vmatprep.subr.mxu0 0.0
        %v1584 = vand.u32 %v299, 4294901760
        %v1585 = vsub.f32 %v299, %v1584
        %v1586 = vand.u32 %v1585, 4294901760
        %v1587 = vsub.f32 %v1585, %v1586
        %v1588 = vand.u32 %v1587, 4294901760
        %1589 = vmatpush1.msra.mxu0 %v1588
        %1590 = vmatprep.subr.mxu0 0.0
        %v1591 = vand.u32 %v298, 4294901760
        %v1592 = vsub.f32 %v298, %v1591
        %v1593 = vand.u32 %v1592, 4294901760
        %v1594 = vsub.f32 %v1592, %v1593
        %v1595 = vand.u32 %v1594, 4294901760
        %1596 = vmatpush1.msra.mxu0 %v1595
        %1597 = vmatprep.subr.mxu0 0.0
        %v1598 = vand.u32 %v297, 4294901760
        %v1599 = vsub.f32 %v297, %v1598
        %v1600 = vand.u32 %v1599, 4294901760
        %v1601 = vsub.f32 %v1599, %v1600
        %v1602 = vand.u32 %v1601, 4294901760
        %1603 = vmatpush1.msra.mxu0 %v1602
        %1604 = vmatprep.subr.mxu0 0.0
        %v1605 = vand.u32 %v296, 4294901760
        %v1606 = vsub.f32 %v296, %v1605
        %v1607 = vand.u32 %v1606, 4294901760
        %v1608 = vsub.f32 %v1606, %v1607
        %v1609 = vand.u32 %v1608, 4294901760
        %1610 = vmatpush1.msra.mxu0 %v1609
        %1611 = vmatprep.subr.mxu0 0.0
        %v1612 = vand.u32 %v295, 4294901760
        %v1613 = vsub.f32 %v295, %v1612
        %v1614 = vand.u32 %v1613, 4294901760
        %v1615 = vsub.f32 %v1613, %v1614
        %v1616 = vand.u32 %v1615, 4294901760
        %1617 = vmatpush1.msra.mxu0 %v1616
        %1618 = vmatprep.subr.mxu0 0.0
        %v1619 = vand.u32 %v294, 4294901760
        %v1620 = vsub.f32 %v294, %v1619
        %v1621 = vand.u32 %v1620, 4294901760
        %v1622 = vsub.f32 %v1620, %v1621
        %v1623 = vand.u32 %v1622, 4294901760
        %1624 = vmatpush1.msra.mxu0 %v1623
        %1625 = vmatprep.subr.mxu0 0.0
        %v1626 = vand.u32 %v293, 4294901760
        %v1627 = vsub.f32 %v293, %v1626
        %v1628 = vand.u32 %v1627, 4294901760
        %v1629 = vsub.f32 %v1627, %v1628
        %v1630 = vand.u32 %v1629, 4294901760
        %1631 = vmatpush1.msra.mxu0 %v1630
        %1632 = vmatprep.subr.mxu0 0.0
        %v1633 = vand.u32 %v292, 4294901760
        %v1634 = vsub.f32 %v292, %v1633
        %v1635 = vand.u32 %v1634, 4294901760
        %v1636 = vsub.f32 %v1634, %v1635
        %v1637 = vand.u32 %v1636, 4294901760
        %1638 = vmatpush1.msra.mxu0 %v1637
        %1639 = vmatprep.subr.mxu0 0.0
        %v1640 = vand.u32 %v291, 4294901760
        %v1641 = vsub.f32 %v291, %v1640
        %v1642 = vand.u32 %v1641, 4294901760
        %v1643 = vsub.f32 %v1641, %v1642
        %v1644 = vand.u32 %v1643, 4294901760
        %1645 = vmatpush1.msra.mxu0 %v1644
        %1646 = vmatprep.subr.mxu0 0.0
        %v1647 = vand.u32 %v290, 4294901760
        %v1648 = vsub.f32 %v290, %v1647
        %v1649 = vand.u32 %v1648, 4294901760
        %v1650 = vsub.f32 %v1648, %v1649
        %v1651 = vand.u32 %v1650, 4294901760
        %1652 = vmatpush1.msra.mxu0 %v1651
        %1653 = vmatprep.subr.mxu0 0.0
        %v1654 = vand.u32 %v289, 4294901760
        %v1655 = vsub.f32 %v289, %v1654
        %v1656 = vand.u32 %v1655, 4294901760
        %v1657 = vsub.f32 %v1655, %v1656
        %v1658 = vand.u32 %v1657, 4294901760
        %1659 = vmatpush1.msra.mxu0 %v1658
        %1660 = vmatprep.subr.mxu0 0.0
        %v1661 = vand.u32 %v288, 4294901760
        %v1662 = vsub.f32 %v288, %v1661
        %v1663 = vand.u32 %v1662, 4294901760
        %v1664 = vsub.f32 %v1662, %v1663
        %v1665 = vand.u32 %v1664, 4294901760
        %1666 = vmatpush1.msra.mxu0 %v1665
        %1667 = vmatprep.subr.mxu0 0.0
        %v1668 = vand.u32 %v287, 4294901760
        %v1669 = vsub.f32 %v287, %v1668
        %v1670 = vand.u32 %v1669, 4294901760
        %v1671 = vsub.f32 %v1669, %v1670
        %v1672 = vand.u32 %v1671, 4294901760
        %1673 = vmatpush1.msra.mxu0 %v1672
        %1674 = vmatprep.subr.mxu0 0.0
        %1675 = vmatpush2.msra.mxu0 0.0
        %1676 = vmatprep.subr.mxu0 0.0
        %1677 = vmatpush2.msra.mxu0 0.0
        %1678 = vmatprep.subr.mxu0 0.0
        %1679 = vmatpush2.msra.mxu0 0.0
        %1680 = vmatprep.subr.mxu0 0.0
        %1681 = vmatpush2.msra.mxu0 0.0
        %1682 = vmatprep.subr.mxu0 0.0
        %1683 = vmatpush2.msra.mxu0 0.0
        %1684 = vmatprep.subr.mxu0 0.0
        %1685 = vmatpush2.msra.mxu0 0.0
        %1686 = vmatprep.subr.mxu0 0.0
        %1687 = vmatpush2.msra.mxu0 0.0
        %1688 = vmatprep.subr.mxu0 0.0
        %1689 = vmatpush2.msra.mxu0 0.0
        %1690 = vmatprep.subr.mxu0 0.0
        %1691 = vmatpush2.msra.mxu0 0.0
        %1692 = vmatprep.subr.mxu0 0.0
        %1693 = vmatpush2.msra.mxu0 0.0
        %1694 = vmatprep.subr.mxu0 0.0
        %1695 = vmatpush2.msra.mxu0 0.0
        %1696 = vmatprep.subr.mxu0 0.0
        %1697 = vmatpush2.msra.mxu0 0.0
        %1698 = vmatprep.subr.mxu0 0.0
        %1699 = vmatpush2.msra.mxu0 0.0
        %1700 = vmatprep.subr.mxu0 0.0
        %1701 = vmatpush2.msra.mxu0 0.0
        %1702 = vmatprep.subr.mxu0 0.0
        %1703 = vmatpush2.msra.mxu0 0.0
        %1704 = vmatprep.subr.mxu0 0.0
        %1705 = vmatpush2.msra.mxu0 0.0
        %1706 = vmatprep.mubr.f32.mxu0 0.0
        %v1707 = vand.u32 %v1459, 4294901760
        %1708 = vmatmul.mubr.f32.gmra.mxu0 %v1707
        %v1709 = vpop.f32.mrf.mxu0
        %v1710 = vadd.f32 %v1549, %v1709
        %v1711 = vpop.f32.mrf.mxu0
        %1712 = vmatprep.mubr.f32.mxu0 0.0
        %v1713 = vand.u32 %v1460, 4294901760
        %1714 = vmatmul.mubr.f32.gmra.mxu0 %v1713
        %v1715 = vpop.f32.mrf.mxu0
        %v1716 = vadd.f32 %v1559, %v1715
        %v1717 = vpop.f32.mrf.mxu0
        %1718 = vdwg.mxu0
        %1719 = vmatprep.subr.mxu0 0.0
        %v1720 = vand.u32 %v302, 4294901760
        %v1721 = vsub.f32 %v302, %v1720
        %1722 = vmatpush1.msra.mxu0 %v1721
        %1723 = vmatprep.subr.mxu0 0.0
        %v1724 = vand.u32 %v301, 4294901760
        %v1725 = vsub.f32 %v301, %v1724
        %1726 = vmatpush1.msra.mxu0 %v1725
        %1727 = vmatprep.subr.mxu0 0.0
        %v1728 = vand.u32 %v300, 4294901760
        %v1729 = vsub.f32 %v300, %v1728
        %1730 = vmatpush1.msra.mxu0 %v1729
        %1731 = vmatprep.subr.mxu0 0.0
        %v1732 = vand.u32 %v299, 4294901760
        %v1733 = vsub.f32 %v299, %v1732
        %1734 = vmatpush1.msra.mxu0 %v1733
        %1735 = vmatprep.subr.mxu0 0.0
        %v1736 = vand.u32 %v298, 4294901760
        %v1737 = vsub.f32 %v298, %v1736
        %1738 = vmatpush1.msra.mxu0 %v1737
        %1739 = vmatprep.subr.mxu0 0.0
        %v1740 = vand.u32 %v297, 4294901760
        %v1741 = vsub.f32 %v297, %v1740
        %1742 = vmatpush1.msra.mxu0 %v1741
        %1743 = vmatprep.subr.mxu0 0.0
        %v1744 = vand.u32 %v296, 4294901760
        %v1745 = vsub.f32 %v296, %v1744
        %1746 = vmatpush1.msra.mxu0 %v1745
        %1747 = vmatprep.subr.mxu0 0.0
        %v1748 = vand.u32 %v295, 4294901760
        %v1749 = vsub.f32 %v295, %v1748
        %1750 = vmatpush1.msra.mxu0 %v1749
        %1751 = vmatprep.subr.mxu0 0.0
        %v1752 = vand.u32 %v294, 4294901760
        %v1753 = vsub.f32 %v294, %v1752
        %1754 = vmatpush1.msra.mxu0 %v1753
        %1755 = vmatprep.subr.mxu0 0.0
        %v1756 = vand.u32 %v293, 4294901760
        %v1757 = vsub.f32 %v293, %v1756
        %1758 = vmatpush1.msra.mxu0 %v1757
        %1759 = vmatprep.subr.mxu0 0.0
        %v1760 = vand.u32 %v292, 4294901760
        %v1761 = vsub.f32 %v292, %v1760
        %1762 = vmatpush1.msra.mxu0 %v1761
        %1763 = vmatprep.subr.mxu0 0.0
        %v1764 = vand.u32 %v291, 4294901760
        %v1765 = vsub.f32 %v291, %v1764
        %1766 = vmatpush1.msra.mxu0 %v1765
        %1767 = vmatprep.subr.mxu0 0.0
        %v1768 = vand.u32 %v290, 4294901760
        %v1769 = vsub.f32 %v290, %v1768
        %1770 = vmatpush1.msra.mxu0 %v1769
        %1771 = vmatprep.subr.mxu0 0.0
        %v1772 = vand.u32 %v289, 4294901760
        %v1773 = vsub.f32 %v289, %v1772
        %1774 = vmatpush1.msra.mxu0 %v1773
        %1775 = vmatprep.subr.mxu0 0.0
        %v1776 = vand.u32 %v288, 4294901760
        %v1777 = vsub.f32 %v288, %v1776
        %1778 = vmatpush1.msra.mxu0 %v1777
        %1779 = vmatprep.subr.mxu0 0.0
        %v1780 = vand.u32 %v287, 4294901760
        %v1781 = vsub.f32 %v287, %v1780
        %1782 = vmatpush1.msra.mxu0 %v1781
        %1783 = vmatprep.subr.mxu0 0.0
        %1784 = vmatpush2.msra.mxu0 0.0
        %1785 = vmatprep.subr.mxu0 0.0
        %1786 = vmatpush2.msra.mxu0 0.0
        %1787 = vmatprep.subr.mxu0 0.0
        %1788 = vmatpush2.msra.mxu0 0.0
        %1789 = vmatprep.subr.mxu0 0.0
        %1790 = vmatpush2.msra.mxu0 0.0
        %1791 = vmatprep.subr.mxu0 0.0
        %1792 = vmatpush2.msra.mxu0 0.0
        %1793 = vmatprep.subr.mxu0 0.0
        %1794 = vmatpush2.msra.mxu0 0.0
        %1795 = vmatprep.subr.mxu0 0.0
        %1796 = vmatpush2.msra.mxu0 0.0
        %1797 = vmatprep.subr.mxu0 0.0
        %1798 = vmatpush2.msra.mxu0 0.0
        %1799 = vmatprep.subr.mxu0 0.0
        %1800 = vmatpush2.msra.mxu0 0.0
        %1801 = vmatprep.subr.mxu0 0.0
        %1802 = vmatpush2.msra.mxu0 0.0
        %1803 = vmatprep.subr.mxu0 0.0
        %1804 = vmatpush2.msra.mxu0 0.0
        %1805 = vmatprep.subr.mxu0 0.0
        %1806 = vmatpush2.msra.mxu0 0.0
        %1807 = vmatprep.subr.mxu0 0.0
        %1808 = vmatpush2.msra.mxu0 0.0
        %1809 = vmatprep.subr.mxu0 0.0
        %1810 = vmatpush2.msra.mxu0 0.0
        %1811 = vmatprep.subr.mxu0 0.0
        %1812 = vmatpush2.msra.mxu0 0.0
        %1813 = vmatprep.subr.mxu0 0.0
        %1814 = vmatpush2.msra.mxu0 0.0
        %1815 = vmatprep.mubr.f32.mxu0 0.0
        %v1816 = vand.u32 %v1459, 4294901760
        %v1817 = vsub.f32 %v1459, %v1816
        %1818 = vmatmul.mubr.f32.gmra.mxu0 %v1817
        %v1819 = vpop.f32.mrf.mxu0
        %v1820 = vadd.f32 %v1710, %v1819
        %v1821 = vpop.f32.mrf.mxu0
        %1822 = vmatprep.mubr.f32.mxu0 0.0
        %v1823 = vand.u32 %v1460, 4294901760
        %v1824 = vsub.f32 %v1460, %v1823
        %1825 = vmatmul.mubr.f32.gmra.mxu0 %v1824
        %v1826 = vpop.f32.mrf.mxu0
        %v1827 = vadd.f32 %v1716, %v1826
        %v1828 = vpop.f32.mrf.mxu0
        %1829 = vdwg.mxu0
        %1830 = vmatprep.subr.mxu0 0.0
        %v1831 = vand.u32 %v302, 4294901760
        %1832 = vmatpush1.msra.mxu0 %v1831
        %1833 = vmatprep.subr.mxu0 0.0
        %v1834 = vand.u32 %v301, 4294901760
        %1835 = vmatpush1.msra.mxu0 %v1834
        %1836 = vmatprep.subr.mxu0 0.0
        %v1837 = vand.u32 %v300, 4294901760
        %1838 = vmatpush1.msra.mxu0 %v1837
        %1839 = vmatprep.subr.mxu0 0.0
        %v1840 = vand.u32 %v299, 4294901760
        %1841 = vmatpush1.msra.mxu0 %v1840
        %1842 = vmatprep.subr.mxu0 0.0
        %v1843 = vand.u32 %v298, 4294901760
        %1844 = vmatpush1.msra.mxu0 %v1843
        %1845 = vmatprep.subr.mxu0 0.0
        %v1846 = vand.u32 %v297, 4294901760
        %1847 = vmatpush1.msra.mxu0 %v1846
        %1848 = vmatprep.subr.mxu0 0.0
        %v1849 = vand.u32 %v296, 4294901760
        %1850 = vmatpush1.msra.mxu0 %v1849
        %1851 = vmatprep.subr.mxu0 0.0
        %v1852 = vand.u32 %v295, 4294901760
        %1853 = vmatpush1.msra.mxu0 %v1852
        %1854 = vmatprep.subr.mxu0 0.0
        %v1855 = vand.u32 %v294, 4294901760
        %1856 = vmatpush1.msra.mxu0 %v1855
        %1857 = vmatprep.subr.mxu0 0.0
        %v1858 = vand.u32 %v293, 4294901760
        %1859 = vmatpush1.msra.mxu0 %v1858
        %1860 = vmatprep.subr.mxu0 0.0
        %v1861 = vand.u32 %v292, 4294901760
        %1862 = vmatpush1.msra.mxu0 %v1861
        %1863 = vmatprep.subr.mxu0 0.0
        %v1864 = vand.u32 %v291, 4294901760
        %1865 = vmatpush1.msra.mxu0 %v1864
        %1866 = vmatprep.subr.mxu0 0.0
        %v1867 = vand.u32 %v290, 4294901760
        %1868 = vmatpush1.msra.mxu0 %v1867
        %1869 = vmatprep.subr.mxu0 0.0
        %v1870 = vand.u32 %v289, 4294901760
        %1871 = vmatpush1.msra.mxu0 %v1870
        %1872 = vmatprep.subr.mxu0 0.0
        %v1873 = vand.u32 %v288, 4294901760
        %1874 = vmatpush1.msra.mxu0 %v1873
        %1875 = vmatprep.subr.mxu0 0.0
        %v1876 = vand.u32 %v287, 4294901760
        %1877 = vmatpush1.msra.mxu0 %v1876
        %1878 = vmatprep.subr.mxu0 0.0
        %1879 = vmatpush2.msra.mxu0 0.0
        %1880 = vmatprep.subr.mxu0 0.0
        %1881 = vmatpush2.msra.mxu0 0.0
        %1882 = vmatprep.subr.mxu0 0.0
        %1883 = vmatpush2.msra.mxu0 0.0
        %1884 = vmatprep.subr.mxu0 0.0
        %1885 = vmatpush2.msra.mxu0 0.0
        %1886 = vmatprep.subr.mxu0 0.0
        %1887 = vmatpush2.msra.mxu0 0.0
        %1888 = vmatprep.subr.mxu0 0.0
        %1889 = vmatpush2.msra.mxu0 0.0
        %1890 = vmatprep.subr.mxu0 0.0
        %1891 = vmatpush2.msra.mxu0 0.0
        %1892 = vmatprep.subr.mxu0 0.0
        %1893 = vmatpush2.msra.mxu0 0.0
        %1894 = vmatprep.subr.mxu0 0.0
        %1895 = vmatpush2.msra.mxu0 0.0
        %1896 = vmatprep.subr.mxu0 0.0
        %1897 = vmatpush2.msra.mxu0 0.0
        %1898 = vmatprep.subr.mxu0 0.0
        %1899 = vmatpush2.msra.mxu0 0.0
        %1900 = vmatprep.subr.mxu0 0.0
        %1901 = vmatpush2.msra.mxu0 0.0
        %1902 = vmatprep.subr.mxu0 0.0
        %1903 = vmatpush2.msra.mxu0 0.0
        %1904 = vmatprep.subr.mxu0 0.0
        %1905 = vmatpush2.msra.mxu0 0.0
        %1906 = vmatprep.subr.mxu0 0.0
        %1907 = vmatpush2.msra.mxu0 0.0
        %1908 = vmatprep.subr.mxu0 0.0
        %1909 = vmatpush2.msra.mxu0 0.0
        %1910 = vmatprep.mubr.f32.mxu0 0.0
        %v1911 = vand.u32 %v1459, 4294901760
        %v1912 = vsub.f32 %v1459, %v1911
        %v1913 = vand.u32 %v1912, 4294901760
        %1914 = vmatmul.mubr.f32.gmra.mxu0 %v1913
        %v1915 = vpop.f32.mrf.mxu0
        %v1916 = vadd.f32 %v1820, %v1915
        %v1917 = vpop.f32.mrf.mxu0
        %1918 = vmatprep.mubr.f32.mxu0 0.0
        %v1919 = vand.u32 %v1460, 4294901760
        %v1920 = vsub.f32 %v1460, %v1919
        %v1921 = vand.u32 %v1920, 4294901760
        %1922 = vmatmul.mubr.f32.gmra.mxu0 %v1921
        %v1923 = vpop.f32.mrf.mxu0
        %v1924 = vadd.f32 %v1827, %v1923
        %v1925 = vpop.f32.mrf.mxu0
        %1926 = vdwg.mxu0
        %1927 = vmatprep.subr.mxu0 0.0
        %v1928 = vand.u32 %v302, 4294901760
        %v1929 = vsub.f32 %v302, %v1928
        %v1930 = vand.u32 %v1929, 4294901760
        %1931 = vmatpush1.msra.mxu0 %v1930
        %1932 = vmatprep.subr.mxu0 0.0
        %v1933 = vand.u32 %v301, 4294901760
        %v1934 = vsub.f32 %v301, %v1933
        %v1935 = vand.u32 %v1934, 4294901760
        %1936 = vmatpush1.msra.mxu0 %v1935
        %1937 = vmatprep.subr.mxu0 0.0
        %v1938 = vand.u32 %v300, 4294901760
        %v1939 = vsub.f32 %v300, %v1938
        %v1940 = vand.u32 %v1939, 4294901760
        %1941 = vmatpush1.msra.mxu0 %v1940
        %1942 = vmatprep.subr.mxu0 0.0
        %v1943 = vand.u32 %v299, 4294901760
        %v1944 = vsub.f32 %v299, %v1943
        %v1945 = vand.u32 %v1944, 4294901760
        %1946 = vmatpush1.msra.mxu0 %v1945
        %1947 = vmatprep.subr.mxu0 0.0
        %v1948 = vand.u32 %v298, 4294901760
        %v1949 = vsub.f32 %v298, %v1948
        %v1950 = vand.u32 %v1949, 4294901760
        %1951 = vmatpush1.msra.mxu0 %v1950
        %1952 = vmatprep.subr.mxu0 0.0
        %v1953 = vand.u32 %v297, 4294901760
        %v1954 = vsub.f32 %v297, %v1953
        %v1955 = vand.u32 %v1954, 4294901760
        %1956 = vmatpush1.msra.mxu0 %v1955
        %1957 = vmatprep.subr.mxu0 0.0
        %v1958 = vand.u32 %v296, 4294901760
        %v1959 = vsub.f32 %v296, %v1958
        %v1960 = vand.u32 %v1959, 4294901760
        %1961 = vmatpush1.msra.mxu0 %v1960
        %1962 = vmatprep.subr.mxu0 0.0
        %v1963 = vand.u32 %v295, 4294901760
        %v1964 = vsub.f32 %v295, %v1963
        %v1965 = vand.u32 %v1964, 4294901760
        %1966 = vmatpush1.msra.mxu0 %v1965
        %1967 = vmatprep.subr.mxu0 0.0
        %v1968 = vand.u32 %v294, 4294901760
        %v1969 = vsub.f32 %v294, %v1968
        %v1970 = vand.u32 %v1969, 4294901760
        %1971 = vmatpush1.msra.mxu0 %v1970
        %1972 = vmatprep.subr.mxu0 0.0
        %v1973 = vand.u32 %v293, 4294901760
        %v1974 = vsub.f32 %v293, %v1973
        %v1975 = vand.u32 %v1974, 4294901760
        %1976 = vmatpush1.msra.mxu0 %v1975
        %1977 = vmatprep.subr.mxu0 0.0
        %v1978 = vand.u32 %v292, 4294901760
        %v1979 = vsub.f32 %v292, %v1978
        %v1980 = vand.u32 %v1979, 4294901760
        %1981 = vmatpush1.msra.mxu0 %v1980
        %1982 = vmatprep.subr.mxu0 0.0
        %v1983 = vand.u32 %v291, 4294901760
        %v1984 = vsub.f32 %v291, %v1983
        %v1985 = vand.u32 %v1984, 4294901760
        %1986 = vmatpush1.msra.mxu0 %v1985
        %1987 = vmatprep.subr.mxu0 0.0
        %v1988 = vand.u32 %v290, 4294901760
        %v1989 = vsub.f32 %v290, %v1988
        %v1990 = vand.u32 %v1989, 4294901760
        %1991 = vmatpush1.msra.mxu0 %v1990
        %1992 = vmatprep.subr.mxu0 0.0
        %v1993 = vand.u32 %v289, 4294901760
        %v1994 = vsub.f32 %v289, %v1993
        %v1995 = vand.u32 %v1994, 4294901760
        %1996 = vmatpush1.msra.mxu0 %v1995
        %1997 = vmatprep.subr.mxu0 0.0
        %v1998 = vand.u32 %v288, 4294901760
        %v1999 = vsub.f32 %v288, %v1998
        %v2000 = vand.u32 %v1999, 4294901760
        %2001 = vmatpush1.msra.mxu0 %v2000
        %2002 = vmatprep.subr.mxu0 0.0
        %v2003 = vand.u32 %v287, 4294901760
        %v2004 = vsub.f32 %v287, %v2003
        %v2005 = vand.u32 %v2004, 4294901760
        %2006 = vmatpush1.msra.mxu0 %v2005
        %2007 = vmatprep.subr.mxu0 0.0
        %2008 = vmatpush2.msra.mxu0 0.0
        %2009 = vmatprep.subr.mxu0 0.0
        %2010 = vmatpush2.msra.mxu0 0.0
        %2011 = vmatprep.subr.mxu0 0.0
        %2012 = vmatpush2.msra.mxu0 0.0
        %2013 = vmatprep.subr.mxu0 0.0
        %2014 = vmatpush2.msra.mxu0 0.0
        %2015 = vmatprep.subr.mxu0 0.0
        %2016 = vmatpush2.msra.mxu0 0.0
        %2017 = vmatprep.subr.mxu0 0.0
        %2018 = vmatpush2.msra.mxu0 0.0
        %2019 = vmatprep.subr.mxu0 0.0
        %2020 = vmatpush2.msra.mxu0 0.0
        %2021 = vmatprep.subr.mxu0 0.0
        %2022 = vmatpush2.msra.mxu0 0.0
        %2023 = vmatprep.subr.mxu0 0.0
        %2024 = vmatpush2.msra.mxu0 0.0
        %2025 = vmatprep.subr.mxu0 0.0
        %2026 = vmatpush2.msra.mxu0 0.0
        %2027 = vmatprep.subr.mxu0 0.0
        %2028 = vmatpush2.msra.mxu0 0.0
        %2029 = vmatprep.subr.mxu0 0.0
        %2030 = vmatpush2.msra.mxu0 0.0
        %2031 = vmatprep.subr.mxu0 0.0
        %2032 = vmatpush2.msra.mxu0 0.0
        %2033 = vmatprep.subr.mxu0 0.0
        %2034 = vmatpush2.msra.mxu0 0.0
        %2035 = vmatprep.subr.mxu0 0.0
        %2036 = vmatpush2.msra.mxu0 0.0
        %2037 = vmatprep.subr.mxu0 0.0
        %2038 = vmatpush2.msra.mxu0 0.0
        %2039 = vmatprep.mubr.f32.mxu0 0.0
        %v2040 = vand.u32 %v1459, 4294901760
        %2041 = vmatmul.mubr.f32.gmra.mxu0 %v2040
        %v2042 = vpop.f32.mrf.mxu0
        %v2043 = vadd.f32 %v1916, %v2042
        %v2044 = vpop.f32.mrf.mxu0
        %2045 = vmatprep.mubr.f32.mxu0 0.0
        %v2046 = vand.u32 %v1460, 4294901760
        %2047 = vmatmul.mubr.f32.gmra.mxu0 %v2046
        %v2048 = vpop.f32.mrf.mxu0
        %v2049 = vadd.f32 %v1924, %v2048
        %v2050 = vpop.f32.mrf.mxu0
        %2051 = vdwg.mxu0
        %2052 = vmatprep.subr.mxu0 0.0
        %v2053 = vand.u32 %v302, 4294901760
        %2054 = vmatpush1.msra.mxu0 %v2053
        %2055 = vmatprep.subr.mxu0 0.0
        %v2056 = vand.u32 %v301, 4294901760
        %2057 = vmatpush1.msra.mxu0 %v2056
        %2058 = vmatprep.subr.mxu0 0.0
        %v2059 = vand.u32 %v300, 4294901760
        %2060 = vmatpush1.msra.mxu0 %v2059
        %2061 = vmatprep.subr.mxu0 0.0
        %v2062 = vand.u32 %v299, 4294901760
        %2063 = vmatpush1.msra.mxu0 %v2062
        %2064 = vmatprep.subr.mxu0 0.0
        %v2065 = vand.u32 %v298, 4294901760
        %2066 = vmatpush1.msra.mxu0 %v2065
        %2067 = vmatprep.subr.mxu0 0.0
        %v2068 = vand.u32 %v297, 4294901760
        %2069 = vmatpush1.msra.mxu0 %v2068
        %2070 = vmatprep.subr.mxu0 0.0
        %v2071 = vand.u32 %v296, 4294901760
        %2072 = vmatpush1.msra.mxu0 %v2071
        %2073 = vmatprep.subr.mxu0 0.0
        %v2074 = vand.u32 %v295, 4294901760
        %2075 = vmatpush1.msra.mxu0 %v2074
        %2076 = vmatprep.subr.mxu0 0.0
        %v2077 = vand.u32 %v294, 4294901760
        %2078 = vmatpush1.msra.mxu0 %v2077
        %2079 = vmatprep.subr.mxu0 0.0
        %v2080 = vand.u32 %v293, 4294901760
        %2081 = vmatpush1.msra.mxu0 %v2080
        %2082 = vmatprep.subr.mxu0 0.0
        %v2083 = vand.u32 %v292, 4294901760
        %2084 = vmatpush1.msra.mxu0 %v2083
        %2085 = vmatprep.subr.mxu0 0.0
        %v2086 = vand.u32 %v291, 4294901760
        %2087 = vmatpush1.msra.mxu0 %v2086
        %2088 = vmatprep.subr.mxu0 0.0
        %v2089 = vand.u32 %v290, 4294901760
        %2090 = vmatpush1.msra.mxu0 %v2089
        %2091 = vmatprep.subr.mxu0 0.0
        %v2092 = vand.u32 %v289, 4294901760
        %2093 = vmatpush1.msra.mxu0 %v2092
        %2094 = vmatprep.subr.mxu0 0.0
        %v2095 = vand.u32 %v288, 4294901760
        %2096 = vmatpush1.msra.mxu0 %v2095
        %2097 = vmatprep.subr.mxu0 0.0
        %v2098 = vand.u32 %v287, 4294901760
        %2099 = vmatpush1.msra.mxu0 %v2098
        %2100 = vmatprep.subr.mxu0 0.0
        %2101 = vmatpush2.msra.mxu0 0.0
        %2102 = vmatprep.subr.mxu0 0.0
        %2103 = vmatpush2.msra.mxu0 0.0
        %2104 = vmatprep.subr.mxu0 0.0
        %2105 = vmatpush2.msra.mxu0 0.0
        %2106 = vmatprep.subr.mxu0 0.0
        %2107 = vmatpush2.msra.mxu0 0.0
        %2108 = vmatprep.subr.mxu0 0.0
        %2109 = vmatpush2.msra.mxu0 0.0
        %2110 = vmatprep.subr.mxu0 0.0
        %2111 = vmatpush2.msra.mxu0 0.0
        %2112 = vmatprep.subr.mxu0 0.0
        %2113 = vmatpush2.msra.mxu0 0.0
        %2114 = vmatprep.subr.mxu0 0.0
        %2115 = vmatpush2.msra.mxu0 0.0
        %2116 = vmatprep.subr.mxu0 0.0
        %2117 = vmatpush2.msra.mxu0 0.0
        %2118 = vmatprep.subr.mxu0 0.0
        %2119 = vmatpush2.msra.mxu0 0.0
        %2120 = vmatprep.subr.mxu0 0.0
        %2121 = vmatpush2.msra.mxu0 0.0
        %2122 = vmatprep.subr.mxu0 0.0
        %2123 = vmatpush2.msra.mxu0 0.0
        %2124 = vmatprep.subr.mxu0 0.0
        %2125 = vmatpush2.msra.mxu0 0.0
        %2126 = vmatprep.subr.mxu0 0.0
        %2127 = vmatpush2.msra.mxu0 0.0
        %2128 = vmatprep.subr.mxu0 0.0
        %2129 = vmatpush2.msra.mxu0 0.0
        %2130 = vmatprep.subr.mxu0 0.0
        %2131 = vmatpush2.msra.mxu0 0.0
        %2132 = vmatprep.mubr.f32.mxu0 0.0
        %v2133 = vand.u32 %v1459, 4294901760
        %2134 = vmatmul.mubr.f32.gmra.mxu0 %v2133
        %v2135 = vpop.f32.mrf.mxu0
        %v2136 = vadd.f32 %v2043, %v2135
        %v2137 = vpop.f32.mrf.mxu0
        %2138 = vmatprep.mubr.f32.mxu0 0.0
        %v2139 = vand.u32 %v1460, 4294901760
        %2140 = vmatmul.mubr.f32.gmra.mxu0 %v2139
        %v2141 = vpop.f32.mrf.mxu0
        %v2142 = vadd.f32 %v2049, %v2141
        %v2143 = vpop.f32.mrf.mxu0
        %2144 = vdwg.mxu0
        %v2145 = vld [vmem:[%s4] sm:$0xf]
        %v2146 = vld [vmem:[%s5] sm:$0xf]
        %2148 = vset.pattern.permute.xlu0 0
        %2149 = vperm.xlu0 %2148, %v2146
        %v2150 = vpop.permute.xlu0 %2149
        %vm2152 = vcmask 130048
        %v2154 = vsel %vm2152, %v2145, 0
        %2156 = vmatprep.subr.mxu0 0.0
        %2157 = vmatpush1.msra.mxu0 0.0
        %2158 = vmatprep.subr.mxu0 0.0
        %2159 = vmatpush1.msra.mxu0 0.0
        %2160 = vmatprep.subr.mxu0 0.0
        %2161 = vmatpush1.msra.mxu0 0.0
        %2162 = vmatprep.subr.mxu0 0.0
        %2163 = vmatpush1.msra.mxu0 0.0
        %2164 = vmatprep.subr.mxu0 0.0
        %2165 = vmatpush1.msra.mxu0 0.0
        %2166 = vmatprep.subr.mxu0 0.0
        %2167 = vmatpush1.msra.mxu0 0.0
        %2168 = vmatprep.subr.mxu0 0.0
        %2169 = vmatpush1.msra.mxu0 0.0
        %2170 = vmatprep.subr.mxu0 0.0
        %2171 = vmatpush1.msra.mxu0 0.0
        %2172 = vmatprep.subr.mxu0 0.0
        %2173 = vmatpush1.msra.mxu0 0.0
        %2174 = vmatprep.subr.mxu0 0.0
        %2175 = vmatpush1.msra.mxu0 0.0
        %2176 = vmatprep.subr.mxu0 0.0
        %2177 = vmatpush1.msra.mxu0 0.0
        %2178 = vmatprep.subr.mxu0 0.0
        %2179 = vmatpush1.msra.mxu0 0.0
        %2180 = vmatprep.subr.mxu0 0.0
        %2181 = vmatpush1.msra.mxu0 0.0
        %2182 = vmatprep.subr.mxu0 0.0
        %2183 = vmatpush1.msra.mxu0 0.0
        %2184 = vmatprep.subr.mxu0 0.0
        %v2185 = vand.u32 %v2142, 4294901760
        %2186 = vmatpush1.msra.mxu0 %v2185
        %2187 = vmatprep.subr.mxu0 0.0
        %v2188 = vand.u32 %v2136, 4294901760
        %2189 = vmatpush1.msra.mxu0 %v2188
        %2190 = vmatprep.subr.mxu0 0.0
        %2191 = vmatpush2.msra.mxu0 0.0
        %2192 = vmatprep.subr.mxu0 0.0
        %2193 = vmatpush2.msra.mxu0 0.0
        %2194 = vmatprep.subr.mxu0 0.0
        %2195 = vmatpush2.msra.mxu0 0.0
        %2196 = vmatprep.subr.mxu0 0.0
        %2197 = vmatpush2.msra.mxu0 0.0
        %2198 = vmatprep.subr.mxu0 0.0
        %2199 = vmatpush2.msra.mxu0 0.0
        %2200 = vmatprep.subr.mxu0 0.0
        %2201 = vmatpush2.msra.mxu0 0.0
        %2202 = vmatprep.subr.mxu0 0.0
        %2203 = vmatpush2.msra.mxu0 0.0
        %2204 = vmatprep.subr.mxu0 0.0
        %2205 = vmatpush2.msra.mxu0 0.0
        %2206 = vmatprep.subr.mxu0 0.0
        %2207 = vmatpush2.msra.mxu0 0.0
        %2208 = vmatprep.subr.mxu0 0.0
        %2209 = vmatpush2.msra.mxu0 0.0
        %2210 = vmatprep.subr.mxu0 0.0
        %2211 = vmatpush2.msra.mxu0 0.0
        %2212 = vmatprep.subr.mxu0 0.0
        %2213 = vmatpush2.msra.mxu0 0.0
        %2214 = vmatprep.subr.mxu0 0.0
        %2215 = vmatpush2.msra.mxu0 0.0
        %2216 = vmatprep.subr.mxu0 0.0
        %2217 = vmatpush2.msra.mxu0 0.0
        %2218 = vmatprep.subr.mxu0 0.0
        %2219 = vmatpush2.msra.mxu0 0.0
        %2220 = vmatprep.subr.mxu0 0.0
        %2221 = vmatpush2.msra.mxu0 0.0
        %2222 = vmatprep.mubr.f32.mxu0 0.0
        %v2223 = vand.u32 %v2154, 4294901760
        %v2224 = vsub.f32 %v2154, %v2223
        %v2225 = vand.u32 %v2224, 4294901760
        %v2226 = vsub.f32 %v2224, %v2225
        %v2227 = vand.u32 %v2226, 4294901760
        %2228 = vmatmul.mubr.f32.gmra.mxu0 %v2227
        %v2229 = vpop.f32.mrf.mxu0
        %v2230 = vadd.f32 %v2150, %v2229
        %v2231 = vpop.f32.mrf.mxu0
        %2232 = vdwg.mxu0
        %2233 = vmatprep.subr.mxu0 0.0
        %2234 = vmatpush1.msra.mxu0 0.0
        %2235 = vmatprep.subr.mxu0 0.0
        %2236 = vmatpush1.msra.mxu0 0.0
        %2237 = vmatprep.subr.mxu0 0.0
        %2238 = vmatpush1.msra.mxu0 0.0
        %2239 = vmatprep.subr.mxu0 0.0
        %2240 = vmatpush1.msra.mxu0 0.0
        %2241 = vmatprep.subr.mxu0 0.0
        %2242 = vmatpush1.msra.mxu0 0.0
        %2243 = vmatprep.subr.mxu0 0.0
        %2244 = vmatpush1.msra.mxu0 0.0
        %2245 = vmatprep.subr.mxu0 0.0
        %2246 = vmatpush1.msra.mxu0 0.0
        %2247 = vmatprep.subr.mxu0 0.0
        %2248 = vmatpush1.msra.mxu0 0.0
        %2249 = vmatprep.subr.mxu0 0.0
        %2250 = vmatpush1.msra.mxu0 0.0
        %2251 = vmatprep.subr.mxu0 0.0
        %2252 = vmatpush1.msra.mxu0 0.0
        %2253 = vmatprep.subr.mxu0 0.0
        %2254 = vmatpush1.msra.mxu0 0.0
        %2255 = vmatprep.subr.mxu0 0.0
        %2256 = vmatpush1.msra.mxu0 0.0
        %2257 = vmatprep.subr.mxu0 0.0
        %2258 = vmatpush1.msra.mxu0 0.0
        %2259 = vmatprep.subr.mxu0 0.0
        %2260 = vmatpush1.msra.mxu0 0.0
        %2261 = vmatprep.subr.mxu0 0.0
        %v2262 = vand.u32 %v2142, 4294901760
        %v2263 = vsub.f32 %v2142, %v2262
        %v2264 = vand.u32 %v2263, 4294901760
        %v2265 = vsub.f32 %v2263, %v2264
        %v2266 = vand.u32 %v2265, 4294901760
        %2267 = vmatpush1.msra.mxu0 %v2266
        %2268 = vmatprep.subr.mxu0 0.0
        %v2269 = vand.u32 %v2136, 4294901760
        %v2270 = vsub.f32 %v2136, %v2269
        %v2271 = vand.u32 %v2270, 4294901760
        %v2272 = vsub.f32 %v2270, %v2271
        %v2273 = vand.u32 %v2272, 4294901760
        %2274 = vmatpush1.msra.mxu0 %v2273
        %2275 = vmatprep.subr.mxu0 0.0
        %2276 = vmatpush2.msra.mxu0 0.0
        %2277 = vmatprep.subr.mxu0 0.0
        %2278 = vmatpush2.msra.mxu0 0.0
        %2279 = vmatprep.subr.mxu0 0.0
        %2280 = vmatpush2.msra.mxu0 0.0
        %2281 = vmatprep.subr.mxu0 0.0
        %2282 = vmatpush2.msra.mxu0 0.0
        %2283 = vmatprep.subr.mxu0 0.0
        %2284 = vmatpush2.msra.mxu0 0.0
        %2285 = vmatprep.subr.mxu0 0.0
        %2286 = vmatpush2.msra.mxu0 0.0
        %2287 = vmatprep.subr.mxu0 0.0
        %2288 = vmatpush2.msra.mxu0 0.0
        %2289 = vmatprep.subr.mxu0 0.0
        %2290 = vmatpush2.msra.mxu0 0.0
        %2291 = vmatprep.subr.mxu0 0.0
        %2292 = vmatpush2.msra.mxu0 0.0
        %2293 = vmatprep.subr.mxu0 0.0
        %2294 = vmatpush2.msra.mxu0 0.0
        %2295 = vmatprep.subr.mxu0 0.0
        %2296 = vmatpush2.msra.mxu0 0.0
        %2297 = vmatprep.subr.mxu0 0.0
        %2298 = vmatpush2.msra.mxu0 0.0
        %2299 = vmatprep.subr.mxu0 0.0
        %2300 = vmatpush2.msra.mxu0 0.0
        %2301 = vmatprep.subr.mxu0 0.0
        %2302 = vmatpush2.msra.mxu0 0.0
        %2303 = vmatprep.subr.mxu0 0.0
        %2304 = vmatpush2.msra.mxu0 0.0
        %2305 = vmatprep.subr.mxu0 0.0
        %2306 = vmatpush2.msra.mxu0 0.0
        %2307 = vmatprep.mubr.f32.mxu0 0.0
        %v2308 = vand.u32 %v2154, 4294901760
        %2309 = vmatmul.mubr.f32.gmra.mxu0 %v2308
        %v2310 = vpop.f32.mrf.mxu0
        %v2311 = vadd.f32 %v2230, %v2310
        %v2312 = vpop.f32.mrf.mxu0
        %2313 = vdwg.mxu0
        %2314 = vmatprep.subr.mxu0 0.0
        %2315 = vmatpush1.msra.mxu0 0.0
        %2316 = vmatprep.subr.mxu0 0.0
        %2317 = vmatpush1.msra.mxu0 0.0
        %2318 = vmatprep.subr.mxu0 0.0
        %2319 = vmatpush1.msra.mxu0 0.0
        %2320 = vmatprep.subr.mxu0 0.0
        %2321 = vmatpush1.msra.mxu0 0.0
        %2322 = vmatprep.subr.mxu0 0.0
        %2323 = vmatpush1.msra.mxu0 0.0
        %2324 = vmatprep.subr.mxu0 0.0
        %2325 = vmatpush1.msra.mxu0 0.0
        %2326 = vmatprep.subr.mxu0 0.0
        %2327 = vmatpush1.msra.mxu0 0.0
        %2328 = vmatprep.subr.mxu0 0.0
        %2329 = vmatpush1.msra.mxu0 0.0
        %2330 = vmatprep.subr.mxu0 0.0
        %2331 = vmatpush1.msra.mxu0 0.0
        %2332 = vmatprep.subr.mxu0 0.0
        %2333 = vmatpush1.msra.mxu0 0.0
        %2334 = vmatprep.subr.mxu0 0.0
        %2335 = vmatpush1.msra.mxu0 0.0
        %2336 = vmatprep.subr.mxu0 0.0
        %2337 = vmatpush1.msra.mxu0 0.0
        %2338 = vmatprep.subr.mxu0 0.0
        %2339 = vmatpush1.msra.mxu0 0.0
        %2340 = vmatprep.subr.mxu0 0.0
        %2341 = vmatpush1.msra.mxu0 0.0
        %2342 = vmatprep.subr.mxu0 0.0
        %v2343 = vand.u32 %v2142, 4294901760
        %v2344 = vsub.f32 %v2142, %v2343
        %2345 = vmatpush1.msra.mxu0 %v2344
        %2346 = vmatprep.subr.mxu0 0.0
        %v2347 = vand.u32 %v2136, 4294901760
        %v2348 = vsub.f32 %v2136, %v2347
        %2349 = vmatpush1.msra.mxu0 %v2348
        %2350 = vmatprep.subr.mxu0 0.0
        %2351 = vmatpush2.msra.mxu0 0.0
        %2352 = vmatprep.subr.mxu0 0.0
        %2353 = vmatpush2.msra.mxu0 0.0
        %2354 = vmatprep.subr.mxu0 0.0
        %2355 = vmatpush2.msra.mxu0 0.0
        %2356 = vmatprep.subr.mxu0 0.0
        %2357 = vmatpush2.msra.mxu0 0.0
        %2358 = vmatprep.subr.mxu0 0.0
        %2359 = vmatpush2.msra.mxu0 0.0
        %2360 = vmatprep.subr.mxu0 0.0
        %2361 = vmatpush2.msra.mxu0 0.0
        %2362 = vmatprep.subr.mxu0 0.0
        %2363 = vmatpush2.msra.mxu0 0.0
        %2364 = vmatprep.subr.mxu0 0.0
        %2365 = vmatpush2.msra.mxu0 0.0
        %2366 = vmatprep.subr.mxu0 0.0
        %2367 = vmatpush2.msra.mxu0 0.0
        %2368 = vmatprep.subr.mxu0 0.0
        %2369 = vmatpush2.msra.mxu0 0.0
        %2370 = vmatprep.subr.mxu0 0.0
        %2371 = vmatpush2.msra.mxu0 0.0
        %2372 = vmatprep.subr.mxu0 0.0
        %2373 = vmatpush2.msra.mxu0 0.0
        %2374 = vmatprep.subr.mxu0 0.0
        %2375 = vmatpush2.msra.mxu0 0.0
        %2376 = vmatprep.subr.mxu0 0.0
        %2377 = vmatpush2.msra.mxu0 0.0
        %2378 = vmatprep.subr.mxu0 0.0
        %2379 = vmatpush2.msra.mxu0 0.0
        %2380 = vmatprep.subr.mxu0 0.0
        %2381 = vmatpush2.msra.mxu0 0.0
        %2382 = vmatprep.mubr.f32.mxu0 0.0
        %v2383 = vand.u32 %v2154, 4294901760
        %v2384 = vsub.f32 %v2154, %v2383
        %2385 = vmatmul.mubr.f32.gmra.mxu0 %v2384
        %v2386 = vpop.f32.mrf.mxu0
        %v2387 = vadd.f32 %v2311, %v2386
        %v2388 = vpop.f32.mrf.mxu0
        %2389 = vdwg.mxu0
        %2390 = vmatprep.subr.mxu0 0.0
        %2391 = vmatpush1.msra.mxu0 0.0
        %2392 = vmatprep.subr.mxu0 0.0
        %2393 = vmatpush1.msra.mxu0 0.0
        %2394 = vmatprep.subr.mxu0 0.0
        %2395 = vmatpush1.msra.mxu0 0.0
        %2396 = vmatprep.subr.mxu0 0.0
        %2397 = vmatpush1.msra.mxu0 0.0
        %2398 = vmatprep.subr.mxu0 0.0
        %2399 = vmatpush1.msra.mxu0 0.0
        %2400 = vmatprep.subr.mxu0 0.0
        %2401 = vmatpush1.msra.mxu0 0.0
        %2402 = vmatprep.subr.mxu0 0.0
        %2403 = vmatpush1.msra.mxu0 0.0
        %2404 = vmatprep.subr.mxu0 0.0
        %2405 = vmatpush1.msra.mxu0 0.0
        %2406 = vmatprep.subr.mxu0 0.0
        %2407 = vmatpush1.msra.mxu0 0.0
        %2408 = vmatprep.subr.mxu0 0.0
        %2409 = vmatpush1.msra.mxu0 0.0
        %2410 = vmatprep.subr.mxu0 0.0
        %2411 = vmatpush1.msra.mxu0 0.0
        %2412 = vmatprep.subr.mxu0 0.0
        %2413 = vmatpush1.msra.mxu0 0.0
        %2414 = vmatprep.subr.mxu0 0.0
        %2415 = vmatpush1.msra.mxu0 0.0
        %2416 = vmatprep.subr.mxu0 0.0
        %2417 = vmatpush1.msra.mxu0 0.0
        %2418 = vmatprep.subr.mxu0 0.0
        %v2419 = vand.u32 %v2142, 4294901760
        %2420 = vmatpush1.msra.mxu0 %v2419
        %2421 = vmatprep.subr.mxu0 0.0
        %v2422 = vand.u32 %v2136, 4294901760
        %2423 = vmatpush1.msra.mxu0 %v2422
        %2424 = vmatprep.subr.mxu0 0.0
        %2425 = vmatpush2.msra.mxu0 0.0
        %2426 = vmatprep.subr.mxu0 0.0
        %2427 = vmatpush2.msra.mxu0 0.0
        %2428 = vmatprep.subr.mxu0 0.0
        %2429 = vmatpush2.msra.mxu0 0.0
        %2430 = vmatprep.subr.mxu0 0.0
        %2431 = vmatpush2.msra.mxu0 0.0
        %2432 = vmatprep.subr.mxu0 0.0
        %2433 = vmatpush2.msra.mxu0 0.0
        %2434 = vmatprep.subr.mxu0 0.0
        %2435 = vmatpush2.msra.mxu0 0.0
        %2436 = vmatprep.subr.mxu0 0.0
        %2437 = vmatpush2.msra.mxu0 0.0
        %2438 = vmatprep.subr.mxu0 0.0
        %2439 = vmatpush2.msra.mxu0 0.0
        %2440 = vmatprep.subr.mxu0 0.0
        %2441 = vmatpush2.msra.mxu0 0.0
        %2442 = vmatprep.subr.mxu0 0.0
        %2443 = vmatpush2.msra.mxu0 0.0
        %2444 = vmatprep.subr.mxu0 0.0
        %2445 = vmatpush2.msra.mxu0 0.0
        %2446 = vmatprep.subr.mxu0 0.0
        %2447 = vmatpush2.msra.mxu0 0.0
        %2448 = vmatprep.subr.mxu0 0.0
        %2449 = vmatpush2.msra.mxu0 0.0
        %2450 = vmatprep.subr.mxu0 0.0
        %2451 = vmatpush2.msra.mxu0 0.0
        %2452 = vmatprep.subr.mxu0 0.0
        %2453 = vmatpush2.msra.mxu0 0.0
        %2454 = vmatprep.subr.mxu0 0.0
        %2455 = vmatpush2.msra.mxu0 0.0
        %2456 = vmatprep.mubr.f32.mxu0 0.0
        %v2457 = vand.u32 %v2154, 4294901760
        %v2458 = vsub.f32 %v2154, %v2457
        %v2459 = vand.u32 %v2458, 4294901760
        %2460 = vmatmul.mubr.f32.gmra.mxu0 %v2459
        %v2461 = vpop.f32.mrf.mxu0
        %v2462 = vadd.f32 %v2387, %v2461
        %v2463 = vpop.f32.mrf.mxu0
        %2464 = vdwg.mxu0
        %2465 = vmatprep.subr.mxu0 0.0
        %2466 = vmatpush1.msra.mxu0 0.0
        %2467 = vmatprep.subr.mxu0 0.0
        %2468 = vmatpush1.msra.mxu0 0.0
        %2469 = vmatprep.subr.mxu0 0.0
        %2470 = vmatpush1.msra.mxu0 0.0
        %2471 = vmatprep.subr.mxu0 0.0
        %2472 = vmatpush1.msra.mxu0 0.0
        %2473 = vmatprep.subr.mxu0 0.0
        %2474 = vmatpush1.msra.mxu0 0.0
        %2475 = vmatprep.subr.mxu0 0.0
        %2476 = vmatpush1.msra.mxu0 0.0
        %2477 = vmatprep.subr.mxu0 0.0
        %2478 = vmatpush1.msra.mxu0 0.0
        %2479 = vmatprep.subr.mxu0 0.0
        %2480 = vmatpush1.msra.mxu0 0.0
        %2481 = vmatprep.subr.mxu0 0.0
        %2482 = vmatpush1.msra.mxu0 0.0
        %2483 = vmatprep.subr.mxu0 0.0
        %2484 = vmatpush1.msra.mxu0 0.0
        %2485 = vmatprep.subr.mxu0 0.0
        %2486 = vmatpush1.msra.mxu0 0.0
        %2487 = vmatprep.subr.mxu0 0.0
        %2488 = vmatpush1.msra.mxu0 0.0
        %2489 = vmatprep.subr.mxu0 0.0
        %2490 = vmatpush1.msra.mxu0 0.0
        %2491 = vmatprep.subr.mxu0 0.0
        %2492 = vmatpush1.msra.mxu0 0.0
        %2493 = vmatprep.subr.mxu0 0.0
        %v2494 = vand.u32 %v2142, 4294901760
        %v2495 = vsub.f32 %v2142, %v2494
        %v2496 = vand.u32 %v2495, 4294901760
        %2497 = vmatpush1.msra.mxu0 %v2496
        %2498 = vmatprep.subr.mxu0 0.0
        %v2499 = vand.u32 %v2136, 4294901760
        %v2500 = vsub.f32 %v2136, %v2499
        %v2501 = vand.u32 %v2500, 4294901760
        %2502 = vmatpush1.msra.mxu0 %v2501
        %2503 = vmatprep.subr.mxu0 0.0
        %2504 = vmatpush2.msra.mxu0 0.0
        %2505 = vmatprep.subr.mxu0 0.0
        %2506 = vmatpush2.msra.mxu0 0.0
        %2507 = vmatprep.subr.mxu0 0.0
        %2508 = vmatpush2.msra.mxu0 0.0
        %2509 = vmatprep.subr.mxu0 0.0
        %2510 = vmatpush2.msra.mxu0 0.0
        %2511 = vmatprep.subr.mxu0 0.0
        %2512 = vmatpush2.msra.mxu0 0.0
        %2513 = vmatprep.subr.mxu0 0.0
        %2514 = vmatpush2.msra.mxu0 0.0
        %2515 = vmatprep.subr.mxu0 0.0
        %2516 = vmatpush2.msra.mxu0 0.0
        %2517 = vmatprep.subr.mxu0 0.0
        %2518 = vmatpush2.msra.mxu0 0.0
        %2519 = vmatprep.subr.mxu0 0.0
        %2520 = vmatpush2.msra.mxu0 0.0
        %2521 = vmatprep.subr.mxu0 0.0
        %2522 = vmatpush2.msra.mxu0 0.0
        %2523 = vmatprep.subr.mxu0 0.0
        %2524 = vmatpush2.msra.mxu0 0.0
        %2525 = vmatprep.subr.mxu0 0.0
        %2526 = vmatpush2.msra.mxu0 0.0
        %2527 = vmatprep.subr.mxu0 0.0
        %2528 = vmatpush2.msra.mxu0 0.0
        %2529 = vmatprep.subr.mxu0 0.0
        %2530 = vmatpush2.msra.mxu0 0.0
        %2531 = vmatprep.subr.mxu0 0.0
        %2532 = vmatpush2.msra.mxu0 0.0
        %2533 = vmatprep.subr.mxu0 0.0
        %2534 = vmatpush2.msra.mxu0 0.0
        %2535 = vmatprep.mubr.f32.mxu0 0.0
        %v2536 = vand.u32 %v2154, 4294901760
        %2537 = vmatmul.mubr.f32.gmra.mxu0 %v2536
        %v2538 = vpop.f32.mrf.mxu0
        %v2539 = vadd.f32 %v2462, %v2538
        %v2540 = vpop.f32.mrf.mxu0
        %2541 = vdwg.mxu0
        %2542 = vmatprep.subr.mxu0 0.0
        %2543 = vmatpush1.msra.mxu0 0.0
        %2544 = vmatprep.subr.mxu0 0.0
        %2545 = vmatpush1.msra.mxu0 0.0
        %2546 = vmatprep.subr.mxu0 0.0
        %2547 = vmatpush1.msra.mxu0 0.0
        %2548 = vmatprep.subr.mxu0 0.0
        %2549 = vmatpush1.msra.mxu0 0.0
        %2550 = vmatprep.subr.mxu0 0.0
        %2551 = vmatpush1.msra.mxu0 0.0
        %2552 = vmatprep.subr.mxu0 0.0
        %2553 = vmatpush1.msra.mxu0 0.0
        %2554 = vmatprep.subr.mxu0 0.0
        %2555 = vmatpush1.msra.mxu0 0.0
        %2556 = vmatprep.subr.mxu0 0.0
        %2557 = vmatpush1.msra.mxu0 0.0
        %2558 = vmatprep.subr.mxu0 0.0
        %2559 = vmatpush1.msra.mxu0 0.0
        %2560 = vmatprep.subr.mxu0 0.0
        %2561 = vmatpush1.msra.mxu0 0.0
        %2562 = vmatprep.subr.mxu0 0.0
        %2563 = vmatpush1.msra.mxu0 0.0
        %2564 = vmatprep.subr.mxu0 0.0
        %2565 = vmatpush1.msra.mxu0 0.0
        %2566 = vmatprep.subr.mxu0 0.0
        %2567 = vmatpush1.msra.mxu0 0.0
        %2568 = vmatprep.subr.mxu0 0.0
        %2569 = vmatpush1.msra.mxu0 0.0
        %2570 = vmatprep.subr.mxu0 0.0
        %v2571 = vand.u32 %v2142, 4294901760
        %2572 = vmatpush1.msra.mxu0 %v2571
        %2573 = vmatprep.subr.mxu0 0.0
        %v2574 = vand.u32 %v2136, 4294901760
        %2575 = vmatpush1.msra.mxu0 %v2574
        %2576 = vmatprep.subr.mxu0 0.0
        %2577 = vmatpush2.msra.mxu0 0.0
        %2578 = vmatprep.subr.mxu0 0.0
        %2579 = vmatpush2.msra.mxu0 0.0
        %2580 = vmatprep.subr.mxu0 0.0
        %2581 = vmatpush2.msra.mxu0 0.0
        %2582 = vmatprep.subr.mxu0 0.0
        %2583 = vmatpush2.msra.mxu0 0.0
        %2584 = vmatprep.subr.mxu0 0.0
        %2585 = vmatpush2.msra.mxu0 0.0
        %2586 = vmatprep.subr.mxu0 0.0
        %2587 = vmatpush2.msra.mxu0 0.0
        %2588 = vmatprep.subr.mxu0 0.0
        %2589 = vmatpush2.msra.mxu0 0.0
        %2590 = vmatprep.subr.mxu0 0.0
        %2591 = vmatpush2.msra.mxu0 0.0
        %2592 = vmatprep.subr.mxu0 0.0
        %2593 = vmatpush2.msra.mxu0 0.0
        %2594 = vmatprep.subr.mxu0 0.0
        %2595 = vmatpush2.msra.mxu0 0.0
        %2596 = vmatprep.subr.mxu0 0.0
        %2597 = vmatpush2.msra.mxu0 0.0
        %2598 = vmatprep.subr.mxu0 0.0
        %2599 = vmatpush2.msra.mxu0 0.0
        %2600 = vmatprep.subr.mxu0 0.0
        %2601 = vmatpush2.msra.mxu0 0.0
        %2602 = vmatprep.subr.mxu0 0.0
        %2603 = vmatpush2.msra.mxu0 0.0
        %2604 = vmatprep.subr.mxu0 0.0
        %2605 = vmatpush2.msra.mxu0 0.0
        %2606 = vmatprep.subr.mxu0 0.0
        %2607 = vmatpush2.msra.mxu0 0.0
        %2608 = vmatprep.mubr.f32.mxu0 0.0
        %v2609 = vand.u32 %v2154, 4294901760
        %2610 = vmatmul.mubr.f32.gmra.mxu0 %v2609
        %v2611 = vpop.f32.mrf.mxu0
        %v2612 = vadd.f32 %v2539, %v2611
        %v2613 = vpop.f32.mrf.mxu0
        %2614 = vdwg.mxu0
        %2615 = vst [vmem:[%s282] sm:$0xf] %v2612
        %s2616 = sand.u32 %s167, 1
        %s2617 = scalar_lea.sflag [#allocation4], %s2616
        %s2618 = sand.u32 %s167, 1
        %s2619 = smul.addr %s2618, 4
        %s2620 = scalar_lea.vmem [#allocation5], %s2619
        // Predicated region
        $region49: #{tpu_custom_call.1} parent=43 // pred_check
          %p2621 = pneg %p177
        $region50: #{tpu_custom_call.1} parent=43 // pred_check_branch
          %2623 = sbr.rel (%p2621) target = $region52
        $region51: #{tpu_custom_call.1} parent=43 // pred_region
          %s2625 = ssub.s32 64, 64
          %2626 = vsyncadd %s2617, %s2625
          %s2627 = smul.addr %s23, 64
          %s2628 = scalar_lea.hbm %s6, %s2627
          %s2630 = sshll.u32 %s2620, 4
          %s2631 = int_to_ptr.vmem [resolvable:$true] %s2630
          %2633 = dma.vmem_to_hbm [thread:$0]  %s2631, 64, %s2628, %s2617
        $region52: #{tpu_custom_call.1} parent=43 // pred_fallthru
          _
      $region44: #{tpu_custom_call.1} parent=5 // pred_fallthru
        _
      %p2634 = scmp.le.s32.totalorder 2, %s18
      // Predicated region
      $region53: #{tpu_custom_call.1} parent=5 // pred_check
        %p2635 = pneg %p2634
      $region54: #{tpu_custom_call.1} parent=5 // pred_check_branch
        %2637 = sbr.rel (%p2635) target = $region56
      $region55: #{tpu_custom_call.1} parent=5 // pred_region
        %s2638 = ssub.s32 %s18, 2
        // Predicated region
        $region57: #{tpu_custom_call.1} parent=55 // pred_check
          %p2639 = pneg %p183
        $region58: #{tpu_custom_call.1} parent=55 // pred_check_branch
          %2641 = sbr.rel (%p2639) target = $region60
        $region59: #{tpu_custom_call.1} parent=55 // pred_region
          %s2642 = sand.u32 %s168, 1
          %s2643 = scalar_lea.sflag [#allocation4], %s2642
          %s2644 = sand.u32 %s168, 1
          %s2645 = smul.addr %s2644, 4
          %s2646 = scalar_lea.vmem [#allocation5], %s2645
          %2647 = dma.done %s2643, 64
        $region60: #{tpu_custom_call.1} parent=55 // pred_fallthru
          _
      $region56: #{tpu_custom_call.1} parent=5 // pred_fallthru
        _
    $region6: #{tpu_custom_call.1} parent=1 // loop_footer
      %s22 = sadd.s32 1, %s18
    $region7: #{tpu_custom_call.1} parent=1 // loop_footer_branch
      %17 = sbr.rel target = $region3
    $region8: #{tpu_custom_call.1} parent=1 // loop_exit
      _
    %2648 = vsyncpa [#allocation3], 1
    %s2649 = scalar_lea.sflag [#allocation3], 1
    %2650 = vsyncpa %s2649, 1
    %2651 = vsyncpa [#allocation4], 1
    %s2652 = scalar_lea.sflag [#allocation4], 1
    %2653 = vsyncpa %s2652, 1

</llo_original>
